<compile_context>
chip_gen: v6e
topology: v6e:2x2x1
jax: 0.10.0
libtpu: 0.0.40
codegen_flags: <defaults>
</compile_context>

<pallas_src>
import jax
import jax.numpy as jnp
from jax.experimental import pallas as pl
from jax.experimental.pallas import tpu as pltpu


# ----------------------------- kernels -----------------------------


def _ffn_resident_kernel(x_ref, w13_ref, b13_ref, w2_ref, b2_ref, o_ref):
    """Full-weight-resident path. grid = (token_tiles,); weights DMA'd once."""
    x = x_ref[...].astype(w13_ref.dtype)                      # in-kernel bf16 cast
    h13 = jnp.dot(x, w13_ref[...], preferred_element_type=jnp.float32)
    h13 = h13 + b13_ref[...]                                  # bias in f32
    th = h13.shape[1] // 2                                    # static
    h1 = h13[:, :th]
    h3 = h13[:, th:]
    gate = h1 * jax.nn.sigmoid(h1) * h3                       # silu(h1)*h3, f32
    out = jnp.dot(gate.astype(w2_ref.dtype), w2_ref[...],
                  preferred_element_type=jnp.float32) + b2_ref[...]
    o_ref[...] = out.astype(o_ref.dtype)


def _ffn_streaming_kernel(x_ref, w13_ref, b13_ref, w2_ref, b2_ref, o_ref, acc_ref):
    """Weight-streaming path. grid = (token_tiles, hidden_tiles); h is reduction."""
    h_idx = pl.program_id(1)

    @pl.when(h_idx == 0)
    def _():
        acc_ref[...] = jnp.zeros_like(acc_ref)

    x = x_ref[...].astype(w13_ref.dtype)
    h13 = jnp.dot(x, w13_ref[...], preferred_element_type=jnp.float32)
    h13 = h13 + b13_ref[...]
    th = h13.shape[1] // 2
    h1 = h13[:, :th]
    h3 = h13[:, th:]
    gate = h1 * jax.nn.sigmoid(h1) * h3
    acc_ref[...] += jnp.dot(gate.astype(w2_ref.dtype), w2_ref[...],
                            preferred_element_type=jnp.float32)

    @pl.when(h_idx == pl.num_programs(1) - 1)
    def _():
        o_ref[...] = (acc_ref[...] + b2_ref[...]).astype(o_ref.dtype)


# --------------------------- planning -------------------------------


def _round_up(x, m):
    return ((x + m - 1) // m) * m


def _cdiv(a, b):
    return (a + b - 1) // b


def _vmem_capacity_bytes():
    """Generation-aware VMEM capacity (128 MiB on v5e/v6e, 64 MiB on v7x)."""
    try:
        info = pltpu.get_tpu_info()
        cap = int(getattr(info, "vmem_capacity_bytes", 0) or 0)
        if cap > 0:
            return cap
    except Exception:
        pass
    return 64 * 2**20  # conservative fallback (v7x floor)


def _budget_bytes(block_m, block_h, n_h, d_in, d_out, x_isize, w_isize, out_isize):
    """Conservative VMEM estimate: double-buffered pipelined tiles + f32 scratch."""
    x_tile = block_m * d_in * x_isize
    w13_tile = d_in * 2 * block_h * w_isize
    b13_tile = 2 * block_h * 4
    w2_tile = block_h * d_out * w_isize
    b2_tile = d_out * 4
    out_tile = block_m * d_out * out_isize
    acc = block_m * d_out * 4 if n_h > 1 else 0
    interm = block_m * 2 * block_h * 4 + block_m * block_h * 4  # f32 h13 + gate
    return (2 * (x_tile + w13_tile + b13_tile + w2_tile + b2_tile + out_tile)
            + acc + interm)


def plan_ffn(d_in, hidden, d_out, *, x_dtype, w_dtype, out_dtype, block_m=512):
    """Pick (block_m, block_h, n_h, vmem_limit) for the current TPU generation."""
    x_isize = jnp.dtype(x_dtype).itemsize
    w_isize = jnp.dtype(w_dtype).itemsize
    out_isize = jnp.dtype(out_dtype).itemsize
    usable = int(_vmem_capacity_bytes() * 0.80)

    bm = max(128, _round_up(min(int(block_m), 1024), 128))

    def fits(m, bh, nh):
        return _budget_bytes(m, bh, nh, d_in, d_out, x_isize, w_isize, out_isize) <= usable

    bh, nh = hidden, 1
    while True:
        # Prefer full weight residency: weights DMA'd exactly once for the grid.
        if fits(bm, hidden, 1):
            bh, nh = hidden, 1
            break
        # Otherwise stream the hidden axis with the largest tile that fits.
        chosen = None
        for cand in (2048, 1024, 768, 512, 384, 256, 128):
            if cand < hidden and hidden % cand == 0 and fits(bm, cand, hidden // cand):
                chosen = cand
                break
        if chosen is not None:
            bh, nh = chosen, hidden // chosen
            break
        # Last resort: shrink the token tile (keep it >= 128).
        if bm > 128:
            bm = max(128, bm // 2)
            continue
        # Nothing fits even at the smallest tiles; pick the smallest legal
        # hidden tile and rely on the raised vmem_limit below.
        bh = hidden
        for cand in (128, 256, 512):
            if hidden % cand == 0:
                bh = cand
                break
        nh = hidden // bh
        break

    budget = _budget_bytes(bm, bh, nh, d_in, d_out, x_isize, w_isize, out_isize)
    vmem_limit = int(max(32 * 2**20, min(usable, budget + (4 << 20))))
    return {"block_m": bm, "block_h": bh, "n_h": nh, "vmem_limit": vmem_limit}


def fuse_ffn_params(params, block_h):
    """Interleave w1|w3 (and b1|b3) ONCE at load time so each hidden tile is a
    single contiguous (d_in, 2*block_h) slab (one DMA stream, one MXU pass)."""
    w1, b1, w3, b3, w2, b2 = (params["w1"], params["b1"], params["w3"],
                              params["b3"], params["w2"], params["b2"])
    d_in, hidden = w1.shape
    n_h = hidden // block_h
    w13 = jnp.concatenate([w1.reshape(d_in, n_h, block_h),
                           w3.reshape(d_in, n_h, block_h)],
                          axis=2).reshape(d_in, 2 * hidden)
    b13 = jnp.concatenate([b1.reshape(1, n_h, block_h).astype(jnp.float32),
                           b3.reshape(1, n_h, block_h).astype(jnp.float32)],
                          axis=2).reshape(1, 2 * hidden)
    return {"w13": w13, "b13": b13, "w2": w2,
            "b2": b2.reshape(1, -1).astype(jnp.float32),
            "block_h": int(block_h), "n_h": int(n_h),
            "d_in": int(d_in), "hidden": int(hidden), "d_out": int(w2.shape[1])}


# ----------------------------- forward ------------------------------


def base_feed_forward(x, fused, plan):
    """x: (..., in_features). Returns (..., out_features) in x.dtype."""
    d_in, hidden, d_out = fused["d_in"], fused["hidden"], fused["d_out"]
    block_h, n_h = fused["block_h"], fused["n_h"]
    out_dtype = x.dtype
    orig_shape = x.shape

    x2 = x.reshape(-1, d_in)
    t = x2.shape[0]

    # Token tile: as large as the plan allows, but keep >= 2 tiles when there is
    # enough work so both v7x TensorCores (grid axis 0 is "parallel") stay busy.
    block_m = min(plan["block_m"], _round_up(t, 128))
    if t > 128 and _cdiv(t, block_m) < 2:
        block_m = max(128, _round_up(_cdiv(t, 2), 128))
    t_pad = _round_up(t, block_m)
    if t_pad != t:
        x2 = jnp.pad(x2, ((0, t_pad - t), (0, 0)))
    n_m = t_pad // block_m

    w13, b13, w2, b2 = fused["w13"], fused["b13"], fused["w2"], fused["b2"]
    w_isize = jnp.dtype(w13.dtype).itemsize
    weight_bytes = (w13.size * w_isize + b13.size * 4 + w2.size * w_isize + b2.size * 4)
    act_bytes = (x2.size * jnp.dtype(x2.dtype).itemsize
                 + t_pad * d_out * jnp.dtype(out_dtype).itemsize)
    weight_reads = 1 if n_h == 1 else n_m          # resident weights read once total
    cost = pl.CostEstimate(
        flops=2 * t_pad * d_in * (2 * hidden) + 2 * t_pad * hidden * d_out,
        transcendentals=t_pad * hidden,
        bytes_accessed=act_bytes + weight_reads * weight_bytes)

    if n_h == 1:
        grid_spec = pltpu.PrefetchScalarGridSpec(
            num_scalar_prefetch=0,
            grid=(n_m,),
            in_specs=[
                pl.BlockSpec((block_m, d_in), lambda i: (i, 0)),       # x tile
                pl.BlockSpec((d_in, 2 * hidden), lambda i: (0, 0)),    # fused w1|w3
                pl.BlockSpec((1, 2 * hidden), lambda i: (0, 0)),       # fused b1|b3
                pl.BlockSpec((hidden, d_out), lambda i: (0, 0)),       # w2
                pl.BlockSpec((1, d_out), lambda i: (0, 0)),            # b2
            ],
            out_specs=pl.BlockSpec((block_m, d_out), lambda i: (i, 0)),
        )
        kernel = _ffn_resident_kernel
        dim_sem = ("parallel",)
    else:
        grid_spec = pltpu.PrefetchScalarGridSpec(
            num_scalar_prefetch=0,
            grid=(n_m, n_h),
            in_specs=[
                pl.BlockSpec((block_m, d_in), lambda i, h: (i, 0)),       # x tile
                pl.BlockSpec((d_in, 2 * block_h), lambda i, h: (0, h)),   # fused w1|w3
                pl.BlockSpec((1, 2 * block_h), lambda i, h: (0, h)),      # fused b1|b3
                pl.BlockSpec((block_h, d_out), lambda i, h: (h, 0)),      # w2 tile
                pl.BlockSpec((1, d_out), lambda i, h: (0, 0)),            # b2
            ],
            out_specs=pl.BlockSpec((block_m, d_out), lambda i, h: (i, 0)),
            scratch_shapes=[pltpu.VMEM((block_m, d_out), jnp.float32)],   # f32 acc
        )
        kernel = _ffn_streaming_kernel
        dim_sem = ("parallel", "arbitrary")

    out = pl.pallas_call(
        kernel,
        out_shape=jax.ShapeDtypeStruct((t_pad, d_out), out_dtype),
        grid_spec=grid_spec,
        compiler_params=pltpu.CompilerParams(
            dimension_semantics=dim_sem,
            vmem_limit_bytes=plan["vmem_limit"]),
        cost_estimate=cost,
    )(x2, w13, b13, w2, b2)

    return out[:t].reshape(*orig_shape[:-1], d_out)


# ----------------------------- params -------------------------------


def init_params(key, in_features, hidden_features, out_features,
                multiple_of=256, param_dtype=jnp.bfloat16):
    # Same hidden rounding as BaseFeedForward.__init__.
    hidden = multiple_of * ((hidden_features + multiple_of - 1) // multiple_of)
    k1, k2, k3, k4, k5, k6 = jax.random.split(key, 6)
    scale_in = 1.0 / jnp.sqrt(in_features)
    scale_h = 1.0 / jnp.sqrt(hidden)
    params = {
        "w1": (jax.random.normal(k1, (in_features, hidden), jnp.float32)
               * scale_in).astype(param_dtype),
        "b1": (jax.random.normal(k4, (1, hidden), jnp.float32) * 0.1),
        "w3": (jax.random.normal(k2, (in_features, hidden), jnp.float32)
               * scale_in).astype(param_dtype),
        "b3": (jax.random.normal(k5, (1, hidden), jnp.float32) * 0.1),
        "w2": (jax.random.normal(k3, (hidden, out_features), jnp.float32)
               * scale_h).astype(param_dtype),
        "b2": (jax.random.normal(k6, (1, out_features), jnp.float32) * 0.1),
    }
    return params, hidden


def _reference(x, p):
    """Pure-JAX reference with the same numerics (bf16 matmuls, f32 accum)."""
    xb = x.astype(p["w1"].dtype)
    h1 = jnp.dot(xb, p["w1"], preferred_element_type=jnp.float32) + p["b1"]
    h3 = jnp.dot(xb, p["w3"], preferred_element_type=jnp.float32) + p["b3"]
    gate = h1 * jax.nn.sigmoid(h1) * h3
    out = jnp.dot(gate.astype(p["w2"].dtype), p["w2"],
                  preferred_element_type=jnp.float32) + p["b2"]
    return out.astype(x.dtype)


if __name__ == "__main__":
    key = jax.random.PRNGKey(0)
    B, S = 2, 200                                     # T = 400 -> 2 token tiles of 256
    in_features, hidden_features, out_features = 128, 200, 128   # hidden rounds to 256

    pkey, xkey = jax.random.split(key)
    params, hidden = init_params(pkey, in_features, hidden_features, out_features)
    x = jax.random.normal(xkey, (B, S, in_features), dtype=jnp.float32)

    # Plan tiling for this generation and pre-fuse the weights ONCE (load time).
    plan = plan_ffn(in_features, hidden, out_features,
                    x_dtype=x.dtype, w_dtype=params["w1"].dtype, out_dtype=x.dtype)
    fused = fuse_ffn_params(params, plan["block_h"])

    out = base_feed_forward(x, fused, plan)
    out = jax.block_until_ready(out)

    ref = _reference(x.reshape(-1, in_features), params).reshape(B, S, out_features)
    assert out.shape == (B, S, out_features)
    assert out.dtype == x.dtype
    max_err = float(jnp.max(jnp.abs(out - ref)))
    assert jnp.allclose(out, ref, atol=1e-2, rtol=1e-2), \
        f"mismatch vs reference (max_err={max_err})"

    print("KERNEL_OK")
</pallas_src>

<mosaic_0001>
module attributes {stable_mosaic.version = 11 : i64} {
  func.func @_ffn_resident_kernel(%arg0: i32, %arg1: memref<256x128xf32, #tpu.memory_space<vmem>>, %arg2: memref<128x512xbf16, #tpu.memory_space<vmem>>, %arg3: memref<1x512xf32, #tpu.memory_space<vmem>>, %arg4: memref<256x128xbf16, #tpu.memory_space<vmem>>, %arg5: memref<1x128xf32, #tpu.memory_space<vmem>>, %arg6: memref<256x128xf32, #tpu.memory_space<vmem>>) attributes {dimension_semantics = [#tpu.dimension_semantics<parallel>], iteration_bounds = array<i64: 2>, scalar_prefetch = 0 : i64, scratch_operands = 0 : i64, tpu.core_type = #tpu.core_type<tc>, window_params = [{transform_indices = @transform_0, window_bounds = array<i64: 256, 128>}, {pipeline_mode = #tpu.pipeline_mode<synchronous>, transform_indices = @transform_1, window_bounds = array<i64: 128, 512>}, {pipeline_mode = #tpu.pipeline_mode<synchronous>, transform_indices = @transform_2, window_bounds = array<i64: 1, 512>}, {pipeline_mode = #tpu.pipeline_mode<synchronous>, transform_indices = @transform_3, window_bounds = array<i64: 256, 128>}, {pipeline_mode = #tpu.pipeline_mode<synchronous>, transform_indices = @transform_4, window_bounds = array<i64: 1, 128>}, {transform_indices = @transform_5, window_bounds = array<i64: 256, 128>}]} {
    %c0 = arith.constant 0 : index
    %c0_0 = arith.constant 0 : index
    %0 = vector.load %arg1[%c0, %c0_0] : memref<256x128xf32, #tpu.memory_space<vmem>>, vector<256x128xf32>
    %1 = arith.truncf %0 : vector<256x128xf32> to vector<256x128xbf16>
    %c0_1 = arith.constant 0 : index
    %c0_2 = arith.constant 0 : index
    %2 = vector.load %arg2[%c0_1, %c0_2] : memref<128x512xbf16, #tpu.memory_space<vmem>>, vector<128x512xbf16>
    %cst = arith.constant dense<0.000000e+00> : vector<256x512xf32>
    %3 = tpu.matmul %1, %2, %cst {dimension_numbers = #tpu.dot_dimension_numbers<[1], [0], [0], [1], [0, 0, 1, 1], [], []>} : vector<256x128xbf16>, vector<128x512xbf16>, vector<256x512xf32> -> vector<256x512xf32>
    %c0_3 = arith.constant 0 : index
    %c0_4 = arith.constant 0 : index
    %4 = vector.load %arg3[%c0_3, %c0_4] : memref<1x512xf32, #tpu.memory_space<vmem>>, vector<1x512xf32>
    %5 = vector.broadcast %4 : vector<1x512xf32> to vector<256x512xf32>
    %6 = arith.addf %3, %5 : vector<256x512xf32>
    %7 = vector.extract_strided_slice %6 {offsets = [0, 0], sizes = [256, 256], strides = [1, 1]} : vector<256x512xf32> to vector<256x256xf32>
    %8 = vector.extract_strided_slice %6 {offsets = [0, 256], sizes = [256, 256], strides = [1, 1]} : vector<256x512xf32> to vector<256x256xf32>
    %9 = arith.negf %7 : vector<256x256xf32>
    %10 = math.exp %9 : vector<256x256xf32>
    %cst_5 = arith.constant 1.000000e+00 : f32
    %11 = vector.broadcast %cst_5 : f32 to vector<256x256xf32>
    %12 = arith.addf %11, %10 : vector<256x256xf32>
    %13 = arith.divf %11, %12 : vector<256x256xf32>
    %14 = arith.mulf %7, %13 : vector<256x256xf32>
    %15 = arith.mulf %14, %8 : vector<256x256xf32>
    %16 = arith.truncf %15 : vector<256x256xf32> to vector<256x256xbf16>
    %c0_6 = arith.constant 0 : index
    %c0_7 = arith.constant 0 : index
    %17 = vector.load %arg4[%c0_6, %c0_7] : memref<256x128xbf16, #tpu.memory_space<vmem>>, vector<256x128xbf16>
    %cst_8 = arith.constant dense<0.000000e+00> : vector<256x128xf32>
    %18 = tpu.matmul %16, %17, %cst_8 {dimension_numbers = #tpu.dot_dimension_numbers<[1], [0], [0], [1], [0, 0, 1, 1], [], []>} : vector<256x256xbf16>, vector<256x128xbf16>, vector<256x128xf32> -> vector<256x128xf32>
    %c0_9 = arith.constant 0 : index
    %c0_10 = arith.constant 0 : index
    %19 = vector.load %arg5[%c0_9, %c0_10] : memref<1x128xf32, #tpu.memory_space<vmem>>, vector<1x128xf32>
    %20 = vector.broadcast %19 : vector<1x128xf32> to vector<256x128xf32>
    %21 = arith.addf %18, %20 : vector<256x128xf32>
    %c0_11 = arith.constant 0 : index
    %c0_12 = arith.constant 0 : index
    %22 = vector.load %arg6[%c0_11, %c0_12] : memref<256x128xf32, #tpu.memory_space<vmem>>, vector<256x128xf32>
    tpu.vector_store %arg6[%c0_11, %c0_12], %21 {strides = array<i32>} : memref<256x128xf32, #tpu.memory_space<vmem>>, vector<256x128xf32>,
    return
  }
  func.func @transform_0(%arg0: i32) -> (i32, i32) {
    %c0_i32 = arith.constant 0 : i32
    %c0_i32_0 = arith.constant 0 : i32
    return %arg0, %c0_i32 : i32, i32
  }
  func.func @transform_1(%arg0: i32) -> (i32, i32) {
    %c0_i32 = arith.constant 0 : i32
    %c0_i32_0 = arith.constant 0 : i32
    %c0_i32_1 = arith.constant 0 : i32
    return %c0_i32, %c0_i32_0 : i32, i32
  }
  func.func @transform_2(%arg0: i32) -> (i32, i32) {
    %c0_i32 = arith.constant 0 : i32
    %c0_i32_0 = arith.constant 0 : i32
    %c0_i32_1 = arith.constant 0 : i32
    return %c0_i32, %c0_i32_0 : i32, i32
  }
  func.func @transform_3(%arg0: i32) -> (i32, i32) {
    %c0_i32 = arith.constant 0 : i32
    %c0_i32_0 = arith.constant 0 : i32
    %c0_i32_1 = arith.constant 0 : i32
    return %c0_i32, %c0_i32_0 : i32, i32
  }
  func.func @transform_4(%arg0: i32) -> (i32, i32) {
    %c0_i32 = arith.constant 0 : i32
    %c0_i32_0 = arith.constant 0 : i32
    %c0_i32_1 = arith.constant 0 : i32
    return %c0_i32, %c0_i32_0 : i32, i32
  }
  func.func @transform_5(%arg0: i32) -> (i32, i32) {
    %c0_i32 = arith.constant 0 : i32
    %c0_i32_0 = arith.constant 0 : i32
    return %arg0, %c0_i32 : i32, i32
  }
}

</mosaic_0001>

<llo_original>
// kernel: tpu_custom_call.1
$region0: #{tpu_custom_call.1}
  #allocation0 [shape = 'u32[]', space=smem, size = 0x4, offset = 0x4, fixed_abs, tag = 'smem constant byte address 0x4 - core index']
  #allocation1 [shape = 'u32[144,128]{1,0:T(1,128)}', space=vmem, size = 0x12000, scoped, tag = 'internal scratch']
  %s0 = inlined_call_operand.hbm [shape: f32[512,128], index: 0, kind: input, shape index: {}]
  %s1 = inlined_call_operand.hbm [shape: bf16[128,512], index: 1, kind: input, shape index: {}]
  %s2 = inlined_call_operand.hbm [shape: f32[1,512], index: 2, kind: input, shape index: {}]
  %s3 = inlined_call_operand.hbm [shape: bf16[256,128], index: 3, kind: input, shape index: {}]
  %s4 = inlined_call_operand.vmem [shape: f32[1,128], index: 4, kind: input, shape index: {}]
  %s5 = inlined_call_operand.hbm [shape: f32[512,128], index: 5, kind: output, shape index: {}]
  %s6 = sld [smem:[#allocation0]]
  $region69: #{tpu_custom_call.1} parent=0
    _
  %s8 = ssub.s32 1, %s6
  %s9 = scalar_select 0, %s8, %s6
  $region1: #{tpu_custom_call.1} parent=0
    #allocation2 [shape = 'u8[262144]{0}', space=vmem, size = 0x40000, scoped, tag = 'input window, operand 0']
    #allocation3 [shape = 's32[2]{0}', space=sflag, size = 0x8, scoped, tag = 'scoped memory for tpu_custom_call.1']
    #allocation4 [shape = 's32[2]{0}', space=sflag, size = 0x8, scoped, tag = 'scoped memory for tpu_custom_call.1']
    #allocation5 [shape = 'u8[131072]{0}', space=vmem, size = 0x20000, scoped, tag = 'input window, operand 1, single buffered']
    #allocation6 [shape = 's32[1]{0}', space=sflag, size = 0x4, scoped, tag = 'scoped memory for tpu_custom_call.1']
    #allocation7 [shape = 'u8[2048]{0}', space=vmem, size = 0x800, scoped, tag = 'input window, operand 2, single buffered']
    #allocation8 [shape = 'u8[65536]{0}', space=vmem, size = 0x10000, scoped, tag = 'input window, operand 3, single buffered']
    #allocation9 [shape = 's32[1]{0}', space=sflag, size = 0x4, scoped, tag = 'scoped memory for tpu_custom_call.1']
    #allocation10 [shape = 'u8[262144]{0}', space=vmem, size = 0x40000, scoped, tag = 'output window, operand 0']
    %10 = vsyncpa [#allocation3], 0
    %s11 = scalar_lea.sflag [#allocation3], 1
    %12 = vsyncpa %s11, 0
    %13 = vsyncpa [#allocation6], 0
    %14 = vsyncpa [#allocation9], 0
    %15 = vsyncpa [#allocation4], 0
    %s16 = scalar_lea.sflag [#allocation4], 1
    %17 = vsyncpa %s16, 0
    loop: start=0, step=1, limit=4
    $region2: #{tpu_custom_call.1} parent=1 // loop_pre_header
      _
    $region3: #{tpu_custom_call.1} parent=1 // loop_header
      %s19 = sphi 0, %s23
      %p20 = scmp.ge.s32.totalorder %s19, 4
      %s29 = sphi 0, %s31
      %s32 = sphi 0, %s29
      %s33 = sphi 0, %s32
      %s49 = sphi 0, %s33
      %s53 = sphi 0, %s53
      %s55 = sphi 0, %s53
      %s56 = sphi 0, %s55
      %s70 = sphi 0, %s56
      %s74 = sphi 0, %s74
      %s76 = sphi 0, %s74
      %s77 = sphi 0, %s76
      %s91 = sphi 0, %s77
      %s95 = sphi 0, %s95
      %s97 = sphi 0, %s95
      %s98 = sphi 0, %s97
      %s112 = sphi 0, %s98
      %s116 = sphi 0, %s116
      %s118 = sphi 0, %s116
      %s119 = sphi 0, %s118
      %s133 = sphi 0, %s119
      %s139 = sphi 0, %s141
      %s142 = sphi 0, %s139
      %s143 = sphi 0, %s142
      %s159 = sphi 0, %s143
    $region4: #{tpu_custom_call.1} parent=1 // loop_header_branch
      %22 = sbr.rel (%p20) target = $region8
    $region5: #{tpu_custom_call.1} parent=1 // loop_body
      %s24 = ssub.s32 %s19, 1
      %s25 = ssub.s32 %s19, 2
      %s26 = sadd.s32 %s19, 1
      %s27 = ssub.s32 %s19, %s26
      %p28 = scmp.eq.s32.totalorder %s27, 0
      %s30 = sadd.s32 %s29, 1
      %s31 = scalar_select %p28, %s29, %s30
      %p34 = pneg %p28
      %p35 = scmp.eq.s32.totalorder %s19, 1
      %p36 = por %p34, %p35
      %p37 = scmp.ne.s32.totalorder %s29, %s32
      %p38 = scmp.eq.s32.totalorder %s19, 0
      %p39 = por %p37, %p38
      %p40 = scmp.ne.s32.totalorder %s29, %s32
      %p41 = scmp.eq.s32.totalorder %s24, 1
      %p42 = por %p40, %p41
      %p43 = scmp.ne.s32.totalorder %s32, %s33
      %p44 = scmp.eq.s32.totalorder %s24, 0
      %p45 = por %p43, %p44
      %p46 = scmp.ne.s32.totalorder %s32, %s33
      %p47 = scmp.eq.s32.totalorder %s25, 1
      %p48 = por %p46, %p47
      %p50 = scmp.ne.s32.totalorder %s33, %s49
      %p51 = scmp.eq.s32.totalorder %s25, 0
      %p52 = por %p50, %p51
      %s54 = sadd.s32 %s53, 1
      %p57 = scmp.eq.s32.totalorder %s19, 1
      %p58 = scmp.ne.s32.totalorder %s53, %s55
      %p59 = scmp.eq.s32.totalorder %s19, 0
      %p60 = por %p58, %p59
      %p61 = scmp.ne.s32.totalorder %s53, %s55
      %p62 = scmp.eq.s32.totalorder %s24, 1
      %p63 = por %p61, %p62
      %p64 = scmp.ne.s32.totalorder %s55, %s56
      %p65 = scmp.eq.s32.totalorder %s24, 0
      %p66 = por %p64, %p65
      %p67 = scmp.ne.s32.totalorder %s55, %s56
      %p68 = scmp.eq.s32.totalorder %s25, 1
      %p69 = por %p67, %p68
      %p71 = scmp.ne.s32.totalorder %s56, %s70
      %p72 = scmp.eq.s32.totalorder %s25, 0
      %p73 = por %p71, %p72
      %s75 = sadd.s32 %s74, 1
      %p78 = scmp.eq.s32.totalorder %s19, 1
      %p79 = scmp.ne.s32.totalorder %s74, %s76
      %p80 = scmp.eq.s32.totalorder %s19, 0
      %p81 = por %p79, %p80
      %p82 = scmp.ne.s32.totalorder %s74, %s76
      %p83 = scmp.eq.s32.totalorder %s24, 1
      %p84 = por %p82, %p83
      %p85 = scmp.ne.s32.totalorder %s76, %s77
      %p86 = scmp.eq.s32.totalorder %s24, 0
      %p87 = por %p85, %p86
      %p88 = scmp.ne.s32.totalorder %s76, %s77
      %p89 = scmp.eq.s32.totalorder %s25, 1
      %p90 = por %p88, %p89
      %p92 = scmp.ne.s32.totalorder %s77, %s91
      %p93 = scmp.eq.s32.totalorder %s25, 0
      %p94 = por %p92, %p93
      %s96 = sadd.s32 %s95, 1
      %p99 = scmp.eq.s32.totalorder %s19, 1
      %p100 = scmp.ne.s32.totalorder %s95, %s97
      %p101 = scmp.eq.s32.totalorder %s19, 0
      %p102 = por %p100, %p101
      %p103 = scmp.ne.s32.totalorder %s95, %s97
      %p104 = scmp.eq.s32.totalorder %s24, 1
      %p105 = por %p103, %p104
      %p106 = scmp.ne.s32.totalorder %s97, %s98
      %p107 = scmp.eq.s32.totalorder %s24, 0
      %p108 = por %p106, %p107
      %p109 = scmp.ne.s32.totalorder %s97, %s98
      %p110 = scmp.eq.s32.totalorder %s25, 1
      %p111 = por %p109, %p110
      %p113 = scmp.ne.s32.totalorder %s98, %s112
      %p114 = scmp.eq.s32.totalorder %s25, 0
      %p115 = por %p113, %p114
      %s117 = sadd.s32 %s116, 1
      %p120 = scmp.eq.s32.totalorder %s19, 1
      %p121 = scmp.ne.s32.totalorder %s116, %s118
      %p122 = scmp.eq.s32.totalorder %s19, 0
      %p123 = por %p121, %p122
      %p124 = scmp.ne.s32.totalorder %s116, %s118
      %p125 = scmp.eq.s32.totalorder %s24, 1
      %p126 = por %p124, %p125
      %p127 = scmp.ne.s32.totalorder %s118, %s119
      %p128 = scmp.eq.s32.totalorder %s24, 0
      %p129 = por %p127, %p128
      %p130 = scmp.ne.s32.totalorder %s118, %s119
      %p131 = scmp.eq.s32.totalorder %s25, 1
      %p132 = por %p130, %p131
      %p134 = scmp.ne.s32.totalorder %s119, %s133
      %p135 = scmp.eq.s32.totalorder %s25, 0
      %p136 = por %p134, %p135
      %s137 = ssub.s32 %s19, %s26
      %p138 = scmp.eq.s32.totalorder %s137, 0
      %s140 = sadd.s32 %s139, 1
      %s141 = scalar_select %p138, %s139, %s140
      %p144 = pneg %p138
      %p145 = scmp.eq.s32.totalorder %s19, 1
      %p146 = por %p144, %p145
      %p147 = scmp.ne.s32.totalorder %s139, %s142
      %p148 = scmp.eq.s32.totalorder %s19, 0
      %p149 = por %p147, %p148
      %p150 = scmp.ne.s32.totalorder %s139, %s142
      %p151 = scmp.eq.s32.totalorder %s24, 1
      %p152 = por %p150, %p151
      %p153 = scmp.ne.s32.totalorder %s142, %s143
      %p154 = scmp.eq.s32.totalorder %s24, 0
      %p155 = por %p153, %p154
      %p156 = scmp.ne.s32.totalorder %s142, %s143
      %p157 = scmp.eq.s32.totalorder %s25, 1
      %p158 = por %p156, %p157
      %p160 = scmp.ne.s32.totalorder %s143, %s159
      %p161 = scmp.eq.s32.totalorder %s25, 0
      %p162 = por %p160, %p161
      %p163 = scmp.le.s32.totalorder 1, %s19
      %p164 = scmp.lt.s32.totalorder %s19, 3
      %p165 = pnand %p163, %p164
      %p166 = pneg %p165
      // Predicated region
      $region9: #{tpu_custom_call.1} parent=5 // pred_check
        _
      $region10: #{tpu_custom_call.1} parent=5 // pred_check_branch
        %168 = sbr.rel (%p165) target = $region12
      $region11: #{tpu_custom_call.1} parent=5 // pred_region
        %s169 = ssub.s32 %s19, 1
        // Predicated region
        $region13: #{tpu_custom_call.1} parent=11 // pred_check
          %p170 = pneg %p66
        $region14: #{tpu_custom_call.1} parent=11 // pred_check_branch
          %172 = sbr.rel (%p170) target = $region16
        $region15: #{tpu_custom_call.1} parent=11 // pred_region
          %s174 = ssub.s32 4096, 4096
          %175 = vsyncadd [#allocation6], %s174
          %s176 = sshll.u32 [#allocation5], 4
          %s177 = int_to_ptr.vmem [resolvable:$true] %s176
          %182 = dma.hbm_to_vmem [thread:$0]  %s1, 4096, %s177, [#allocation6], 256, 256, 16
        $region16: #{tpu_custom_call.1} parent=11 // pred_fallthru
          _
        // Predicated region
        $region17: #{tpu_custom_call.1} parent=11 // pred_check
          %p183 = pneg %p87
        $region18: #{tpu_custom_call.1} parent=11 // pred_check_branch
          %185 = sbr.rel (%p183) target = $region20
        $region19: #{tpu_custom_call.1} parent=11 // pred_region
          %s187 = ssub.s32 64, 64
          %188 = vsyncadd [#allocation6], %s187
          %s190 = sshll.u32 [#allocation7], 4
          %s191 = int_to_ptr.vmem [resolvable:$true] %s190
          %193 = dma.hbm_to_vmem [thread:$0]  %s2, 64, %s191, [#allocation6]
        $region20: #{tpu_custom_call.1} parent=11 // pred_fallthru
          _
        // Predicated region
        $region21: #{tpu_custom_call.1} parent=11 // pred_check
          %p194 = pneg %p108
        $region22: #{tpu_custom_call.1} parent=11 // pred_check_branch
          %196 = sbr.rel (%p194) target = $region24
        $region23: #{tpu_custom_call.1} parent=11 // pred_region
          %s198 = ssub.s32 2048, 2048
          %199 = vsyncadd [#allocation9], %s198
          %s200 = sshll.u32 [#allocation8], 4
          %s201 = int_to_ptr.vmem [resolvable:$true] %s200
          %206 = dma.hbm_to_vmem [thread:$0]  %s3, 2048, %s201, [#allocation9], 64, 64, 4
        $region24: #{tpu_custom_call.1} parent=11 // pred_fallthru
          _
        // Predicated region
        $region25: #{tpu_custom_call.1} parent=11 // pred_check
          %p207 = pneg %p129
        $region26: #{tpu_custom_call.1} parent=11 // pred_check_branch
          %209 = sbr.rel (%p207) target = $region28
        $region27: #{tpu_custom_call.1} parent=11 // pred_region
          _
        $region28: #{tpu_custom_call.1} parent=11 // pred_fallthru
          _
      $region12: #{tpu_custom_call.1} parent=5 // pred_fallthru
        _
      %p210 = scmp.lt.s32.totalorder %s19, 2
      // Predicated region
      $region29: #{tpu_custom_call.1} parent=5 // pred_check
        %p211 = pneg %p210
      $region30: #{tpu_custom_call.1} parent=5 // pred_check_branch
        %213 = sbr.rel (%p211) target = $region32
      $region31: #{tpu_custom_call.1} parent=5 // pred_region
        // Predicated region
        $region33: #{tpu_custom_call.1} parent=31 // pred_check
          %p214 = pneg %p39
        $region34: #{tpu_custom_call.1} parent=31 // pred_check_branch
          %216 = sbr.rel (%p214) target = $region36
        $region35: #{tpu_custom_call.1} parent=31 // pred_region
          %s217 = sand.u32 %s29, 1
          %s218 = scalar_lea.sflag [#allocation3], %s217
          %s219 = sand.u32 %s29, 1
          %s220 = smul.addr %s219, 256
          %s221 = scalar_lea.vmem [#allocation2], %s220
          %s222 = smul.u32 32, %s19
          %s224 = ssub.s32 4096, 4096
          %225 = vsyncadd %s218, %s224
          %s226 = smul.addr %s222, 128
          %s227 = scalar_lea.hbm %s0, %s226
          %s228 = sshll.u32 %s221, 4
          %s229 = int_to_ptr.vmem [resolvable:$true] %s228
          %234 = dma.hbm_to_vmem [thread:$0]  %s227, 4096, %s229, %s218, 128, 128, 8
        $region36: #{tpu_custom_call.1} parent=31 // pred_fallthru
          _
      $region32: #{tpu_custom_call.1} parent=5 // pred_fallthru
        _
      %p235 = scmp.le.s32.totalorder 1, %s19
      %p236 = scmp.lt.s32.totalorder %s19, 3
      %p237 = pnand %p235, %p236
      %p238 = pneg %p237
      // Predicated region
      $region37: #{tpu_custom_call.1} parent=5 // pred_check
        _
      $region38: #{tpu_custom_call.1} parent=5 // pred_check_branch
        %240 = sbr.rel (%p237) target = $region40
      $region39: #{tpu_custom_call.1} parent=5 // pred_region
        %s241 = ssub.s32 %s19, 1
        %s242 = sand.u32 %s32, 1
        %s243 = scalar_lea.sflag [#allocation3], %s242
        %s244 = sand.u32 %s32, 1
        %s245 = smul.addr %s244, 256
        %s246 = scalar_lea.vmem [#allocation2], %s245
        // Predicated region
        $region41: #{tpu_custom_call.1} parent=39 // pred_check
          %p247 = pneg %p45
        $region42: #{tpu_custom_call.1} parent=39 // pred_check_branch
          %249 = sbr.rel (%p247) target = $region44
        $region43: #{tpu_custom_call.1} parent=39 // pred_region
          %250 = dma.done %s243, 4096
        $region44: #{tpu_custom_call.1} parent=39 // pred_fallthru
          _
        // Predicated region
        $region45: #{tpu_custom_call.1} parent=39 // pred_check
          %p251 = pneg %p66
        $region46: #{tpu_custom_call.1} parent=39 // pred_check_branch
          %253 = sbr.rel (%p251) target = $region48
        $region47: #{tpu_custom_call.1} parent=39 // pred_region
          %254 = dma.done [#allocation6], 4096
        $region48: #{tpu_custom_call.1} parent=39 // pred_fallthru
          _
        // Predicated region
        $region49: #{tpu_custom_call.1} parent=39 // pred_check
          %p255 = pneg %p87
        $region50: #{tpu_custom_call.1} parent=39 // pred_check_branch
          %257 = sbr.rel (%p255) target = $region52
        $region51: #{tpu_custom_call.1} parent=39 // pred_region
          %258 = dma.done [#allocation6], 64
        $region52: #{tpu_custom_call.1} parent=39 // pred_fallthru
          _
        // Predicated region
        $region53: #{tpu_custom_call.1} parent=39 // pred_check
          %p259 = pneg %p108
        $region54: #{tpu_custom_call.1} parent=39 // pred_check_branch
          %261 = sbr.rel (%p259) target = $region56
        $region55: #{tpu_custom_call.1} parent=39 // pred_region
          %262 = dma.done [#allocation9], 2048
        $region56: #{tpu_custom_call.1} parent=39 // pred_fallthru
          _
        %s263 = sand.u32 %s32, 1
        %s264 = scalar_lea.sflag [#allocation3], %s263
        %s265 = sand.u32 %s32, 1
        %s266 = smul.addr %s265, 256
        %s267 = scalar_lea.vmem [#allocation2], %s266
        %p268 = pneg %p45
        %p269 = pneg %p42
        %p270 = pneg %p66
        %p271 = pneg %p63
        %p272 = pneg %p87
        %p273 = pneg %p84
        %p274 = pneg %p108
        %p275 = pneg %p105
        %p276 = pneg %p129
        %p277 = pneg %p126
        %p278 = pneg %p155
        %p279 = pneg %p152
        %s280 = sand.u32 %s142, 1
        %s281 = scalar_lea.sflag [#allocation4], %s280
        %s282 = sand.u32 %s142, 1
        %s283 = smul.addr %s282, 256
        %s284 = scalar_lea.vmem [#allocation10], %s283
        %s285 = smul.u32 32, %s24
        %s286 = smul.u32 32, %s24
        %v288 = vld [vmem:[%s246] sm:$0xff]
        %v289 = vld [vmem:[%s246 + $0x8] sm:$0xff]
        %v290 = vld [vmem:[%s246 + $0x10] sm:$0xff]
        %v291 = vld [vmem:[%s246 + $0x18] sm:$0xff]
        %v292 = vld [vmem:[%s246 + $0x20] sm:$0xff]
        %v293 = vld [vmem:[%s246 + $0x28] sm:$0xff]
        %v294 = vld [vmem:[%s246 + $0x30] sm:$0xff]
        %v295 = vld [vmem:[%s246 + $0x38] sm:$0xff]
        %v296 = vld [vmem:[%s246 + $0x40] sm:$0xff]
        %v297 = vld [vmem:[%s246 + $0x48] sm:$0xff]
        %v298 = vld [vmem:[%s246 + $0x50] sm:$0xff]
        %v299 = vld [vmem:[%s246 + $0x58] sm:$0xff]
        %v300 = vld [vmem:[%s246 + $0x60] sm:$0xff]
        %v301 = vld [vmem:[%s246 + $0x68] sm:$0xff]
        %v302 = vld [vmem:[%s246 + $0x70] sm:$0xff]
        %v303 = vld [vmem:[%s246 + $0x78] sm:$0xff]
        %v304 = vld [vmem:[%s246 + $0x80] sm:$0xff]
        %v305 = vld [vmem:[%s246 + $0x88] sm:$0xff]
        %v306 = vld [vmem:[%s246 + $0x90] sm:$0xff]
        %v307 = vld [vmem:[%s246 + $0x98] sm:$0xff]
        %v308 = vld [vmem:[%s246 + $0xa0] sm:$0xff]
        %v309 = vld [vmem:[%s246 + $0xa8] sm:$0xff]
        %v310 = vld [vmem:[%s246 + $0xb0] sm:$0xff]
        %v311 = vld [vmem:[%s246 + $0xb8] sm:$0xff]
        %v312 = vld [vmem:[%s246 + $0xc0] sm:$0xff]
        %v313 = vld [vmem:[%s246 + $0xc8] sm:$0xff]
        %v314 = vld [vmem:[%s246 + $0xd0] sm:$0xff]
        %v315 = vld [vmem:[%s246 + $0xd8] sm:$0xff]
        %v316 = vld [vmem:[%s246 + $0xe0] sm:$0xff]
        %v317 = vld [vmem:[%s246 + $0xe8] sm:$0xff]
        %v318 = vld [vmem:[%s246 + $0xf0] sm:$0xff]
        %v319 = vld [vmem:[%s246 + $0xf8] sm:$0xff]
        %v320 = vpack.c.bf16 %v289, %v288
        %v321 = vpack.c.bf16 %v291, %v290
        %v322 = vpack.c.bf16 %v293, %v292
        %v323 = vpack.c.bf16 %v295, %v294
        %v324 = vpack.c.bf16 %v297, %v296
        %v325 = vpack.c.bf16 %v299, %v298
        %v326 = vpack.c.bf16 %v301, %v300
        %v327 = vpack.c.bf16 %v303, %v302
        %v328 = vpack.c.bf16 %v305, %v304
        %v329 = vpack.c.bf16 %v307, %v306
        %v330 = vpack.c.bf16 %v309, %v308
        %v331 = vpack.c.bf16 %v311, %v310
        %v332 = vpack.c.bf16 %v313, %v312
        %v333 = vpack.c.bf16 %v315, %v314
        %v334 = vpack.c.bf16 %v317, %v316
        %v335 = vpack.c.bf16 %v319, %v318
        %v336 = vld [vmem:[#allocation5] sm:$0xff]
        %v337 = vld [vmem:[#allocation5 + $0x8] sm:$0xff]
        %v338 = vld [vmem:[#allocation5 + $0x10] sm:$0xff]
        %v339 = vld [vmem:[#allocation5 + $0x18] sm:$0xff]
        %v340 = vld [vmem:[#allocation5 + $0x20] sm:$0xff]
        %v341 = vld [vmem:[#allocation5 + $0x28] sm:$0xff]
        %v342 = vld [vmem:[#allocation5 + $0x30] sm:$0xff]
        %v343 = vld [vmem:[#allocation5 + $0x38] sm:$0xff]
        %v344 = vld [vmem:[#allocation5 + $0x40] sm:$0xff]
        %v345 = vld [vmem:[#allocation5 + $0x48] sm:$0xff]
        %v346 = vld [vmem:[#allocation5 + $0x50] sm:$0xff]
        %v347 = vld [vmem:[#allocation5 + $0x58] sm:$0xff]
        %v348 = vld [vmem:[#allocation5 + $0x60] sm:$0xff]
        %v349 = vld [vmem:[#allocation5 + $0x68] sm:$0xff]
        %v350 = vld [vmem:[#allocation5 + $0x70] sm:$0xff]
        %v351 = vld [vmem:[#allocation5 + $0x78] sm:$0xff]
        %v352 = vld [vmem:[#allocation5 + $0x80] sm:$0xff]
        %v353 = vld [vmem:[#allocation5 + $0x88] sm:$0xff]
        %v354 = vld [vmem:[#allocation5 + $0x90] sm:$0xff]
        %v355 = vld [vmem:[#allocation5 + $0x98] sm:$0xff]
        %v356 = vld [vmem:[#allocation5 + $0xa0] sm:$0xff]
        %v357 = vld [vmem:[#allocation5 + $0xa8] sm:$0xff]
        %v358 = vld [vmem:[#allocation5 + $0xb0] sm:$0xff]
        %v359 = vld [vmem:[#allocation5 + $0xb8] sm:$0xff]
        %v360 = vld [vmem:[#allocation5 + $0xc0] sm:$0xff]
        %v361 = vld [vmem:[#allocation5 + $0xc8] sm:$0xff]
        %v362 = vld [vmem:[#allocation5 + $0xd0] sm:$0xff]
        %v363 = vld [vmem:[#allocation5 + $0xd8] sm:$0xff]
        %v364 = vld [vmem:[#allocation5 + $0xe0] sm:$0xff]
        %v365 = vld [vmem:[#allocation5 + $0xe8] sm:$0xff]
        %v366 = vld [vmem:[#allocation5 + $0xf0] sm:$0xff]
        %v367 = vld [vmem:[#allocation5 + $0xf8] sm:$0xff]
        %v368 = vld [vmem:[#allocation7] sm:$0xf]
        %v370 = vlaneseq
        %v371 = vshrl.u32 %v370, 7
        %v372 = vsub.s32 0, %v371
        %v373 = vrot.slane %v368, %v372
        %v374 = vlaneseq
        %v375 = vshrl.u32 %v374, 7
        %v376 = vsub.s32 1, %v375
        %v377 = vrot.slane %v368, %v376
        %v378 = vlaneseq
        %v379 = vshrl.u32 %v378, 7
        %v380 = vsub.s32 2, %v379
        %v381 = vrot.slane %v368, %v380
        %v382 = vlaneseq
        %v383 = vshrl.u32 %v382, 7
        %v384 = vsub.s32 3, %v383
        %v385 = vrot.slane %v368, %v384
        %v422 = vunpack.c.l.b16 %v336
        %v423 = vunpack.c.h.b16 %v336
        %v424 = vunpack.c.l.b16 %v337
        %v425 = vunpack.c.h.b16 %v337
        %v426 = vunpack.c.l.b16 %v338
        %v427 = vunpack.c.h.b16 %v338
        %v428 = vunpack.c.l.b16 %v339
        %v429 = vunpack.c.h.b16 %v339
        %v430 = vunpack.c.l.b16 %v340
        %v431 = vunpack.c.h.b16 %v340
        %v432 = vunpack.c.l.b16 %v341
        %v433 = vunpack.c.h.b16 %v341
        %v434 = vunpack.c.l.b16 %v342
        %v435 = vunpack.c.h.b16 %v342
        %v436 = vunpack.c.l.b16 %v343
        %v437 = vunpack.c.h.b16 %v343
        %v438 = vunpack.c.l.b16 %v344
        %v439 = vunpack.c.h.b16 %v344
        %v440 = vunpack.c.l.b16 %v345
        %v441 = vunpack.c.h.b16 %v345
        %v442 = vunpack.c.l.b16 %v346
        %v443 = vunpack.c.h.b16 %v346
        %v444 = vunpack.c.l.b16 %v347
        %v445 = vunpack.c.h.b16 %v347
        %v446 = vunpack.c.l.b16 %v348
        %v447 = vunpack.c.h.b16 %v348
        %v448 = vunpack.c.l.b16 %v349
        %v449 = vunpack.c.h.b16 %v349
        %v450 = vunpack.c.l.b16 %v350
        %v451 = vunpack.c.h.b16 %v350
        %v452 = vunpack.c.l.b16 %v351
        %v453 = vunpack.c.h.b16 %v351
        %v454 = vunpack.c.l.b16 %v352
        %v455 = vunpack.c.h.b16 %v352
        %v456 = vunpack.c.l.b16 %v353
        %v457 = vunpack.c.h.b16 %v353
        %v458 = vunpack.c.l.b16 %v354
        %v459 = vunpack.c.h.b16 %v354
        %v460 = vunpack.c.l.b16 %v355
        %v461 = vunpack.c.h.b16 %v355
        %v462 = vunpack.c.l.b16 %v356
        %v463 = vunpack.c.h.b16 %v356
        %v464 = vunpack.c.l.b16 %v357
        %v465 = vunpack.c.h.b16 %v357
        %v466 = vunpack.c.l.b16 %v358
        %v467 = vunpack.c.h.b16 %v358
        %v468 = vunpack.c.l.b16 %v359
        %v469 = vunpack.c.h.b16 %v359
        %v470 = vunpack.c.l.b16 %v360
        %v471 = vunpack.c.h.b16 %v360
        %v472 = vunpack.c.l.b16 %v361
        %v473 = vunpack.c.h.b16 %v361
        %v474 = vunpack.c.l.b16 %v362
        %v475 = vunpack.c.h.b16 %v362
        %v476 = vunpack.c.l.b16 %v363
        %v477 = vunpack.c.h.b16 %v363
        %v478 = vunpack.c.l.b16 %v364
        %v479 = vunpack.c.h.b16 %v364
        %v480 = vunpack.c.l.b16 %v365
        %v481 = vunpack.c.h.b16 %v365
        %v482 = vunpack.c.l.b16 %v366
        %v483 = vunpack.c.h.b16 %v366
        %v484 = vunpack.c.l.b16 %v367
        %v485 = vunpack.c.h.b16 %v367
        %v486 = vpack.c.b16 %v426, %v422
        %v487 = vpack.c.b16 %v427, %v423
        %v488 = vpack.c.b16 %v428, %v424
        %v489 = vpack.c.b16 %v429, %v425
        %v490 = vpack.c.b16 %v434, %v430
        %v491 = vpack.c.b16 %v435, %v431
        %v492 = vpack.c.b16 %v436, %v432
        %v493 = vpack.c.b16 %v437, %v433
        %v494 = vpack.c.b16 %v442, %v438
        %v495 = vpack.c.b16 %v443, %v439
        %v496 = vpack.c.b16 %v444, %v440
        %v497 = vpack.c.b16 %v445, %v441
        %v498 = vpack.c.b16 %v450, %v446
        %v499 = vpack.c.b16 %v451, %v447
        %v500 = vpack.c.b16 %v452, %v448
        %v501 = vpack.c.b16 %v453, %v449
        %v502 = vpack.c.b16 %v458, %v454
        %v503 = vpack.c.b16 %v459, %v455
        %v504 = vpack.c.b16 %v460, %v456
        %v505 = vpack.c.b16 %v461, %v457
        %v506 = vpack.c.b16 %v466, %v462
        %v507 = vpack.c.b16 %v467, %v463
        %v508 = vpack.c.b16 %v468, %v464
        %v509 = vpack.c.b16 %v469, %v465
        %v510 = vpack.c.b16 %v474, %v470
        %v511 = vpack.c.b16 %v475, %v471
        %v512 = vpack.c.b16 %v476, %v472
        %v513 = vpack.c.b16 %v477, %v473
        %v514 = vpack.c.b16 %v482, %v478
        %v515 = vpack.c.b16 %v483, %v479
        %v516 = vpack.c.b16 %v484, %v480
        %v517 = vpack.c.b16 %v485, %v481
        %550 = vmatprep.subr.bf16.mxu0 %v515
        %551 = vmatpush1.bf16.msra.mxu0 %v514
        %552 = vmatprep.subr.bf16.mxu0 %v511
        %553 = vmatpush1.bf16.msra.mxu0 %v510
        %554 = vmatprep.subr.bf16.mxu0 %v507
        %555 = vmatpush1.bf16.msra.mxu0 %v506
        %556 = vmatprep.subr.bf16.mxu0 %v503
        %557 = vmatpush1.bf16.msra.mxu0 %v502
        %558 = vmatprep.subr.bf16.mxu0 %v499
        %559 = vmatpush1.bf16.msra.mxu0 %v498
        %560 = vmatprep.subr.bf16.mxu0 %v495
        %561 = vmatpush1.bf16.msra.mxu0 %v494
        %562 = vmatprep.subr.bf16.mxu0 %v491
        %563 = vmatpush1.bf16.msra.mxu0 %v490
        %564 = vmatprep.subr.bf16.mxu0 %v487
        %565 = vmatpush1.bf16.msra.mxu0 %v486
        %566 = vmatprep.subr.bf16.mxu0 0
        %567 = vmatpush2.bf16.msra.mxu0 0
        %568 = vmatprep.subr.bf16.mxu0 0
        %569 = vmatpush2.bf16.msra.mxu0 0
        %570 = vmatprep.subr.bf16.mxu0 0
        %571 = vmatpush2.bf16.msra.mxu0 0
        %572 = vmatprep.subr.bf16.mxu0 0
        %573 = vmatpush2.bf16.msra.mxu0 0
        %574 = vmatprep.subr.bf16.mxu0 0
        %575 = vmatpush2.bf16.msra.mxu0 0
        %576 = vmatprep.subr.bf16.mxu0 0
        %577 = vmatpush2.bf16.msra.mxu0 0
        %578 = vmatprep.subr.bf16.mxu0 0
        %579 = vmatpush2.bf16.msra.mxu0 0
        %580 = vmatprep.subr.bf16.mxu0 0
        %581 = vmatpush2.bf16.msra.mxu0 0
        %582 = vmatprep.mubr.bf16.mxu0 0
        %583 = vmatmul.mubr.bf16.gmra.mxu0 %v320
        %v584 = vpop.f32.mrf.mxu0
        %v585 = vadd.f32 %v373, %v584
        %v586 = vpop.f32.mrf.mxu0
        %v587 = vadd.f32 %v377, %v586
        %v588 = vpop.f32.mrf.mxu0
        %v589 = vadd.f32 %v373, %v588
        %v590 = vpop.f32.mrf.mxu0
        %v591 = vadd.f32 %v377, %v590
        %592 = vmatprep.mubr.bf16.mxu0 0
        %593 = vmatmul.mubr.bf16.gmra.mxu0 %v321
        %v594 = vpop.f32.mrf.mxu0
        %v595 = vadd.f32 %v373, %v594
        %v596 = vpop.f32.mrf.mxu0
        %v597 = vadd.f32 %v377, %v596
        %v598 = vpop.f32.mrf.mxu0
        %v599 = vadd.f32 %v373, %v598
        %v600 = vpop.f32.mrf.mxu0
        %v601 = vadd.f32 %v377, %v600
        %602 = vmatprep.mubr.bf16.mxu0 0
        %603 = vmatmul.mubr.bf16.gmra.mxu0 %v322
        %v604 = vpop.f32.mrf.mxu0
        %v605 = vadd.f32 %v373, %v604
        %v606 = vpop.f32.mrf.mxu0
        %v607 = vadd.f32 %v377, %v606
        %v608 = vpop.f32.mrf.mxu0
        %v609 = vadd.f32 %v373, %v608
        %v610 = vpop.f32.mrf.mxu0
        %v611 = vadd.f32 %v377, %v610
        %612 = vmatprep.mubr.bf16.mxu0 0
        %613 = vmatmul.mubr.bf16.gmra.mxu0 %v323
        %v614 = vpop.f32.mrf.mxu0
        %v615 = vadd.f32 %v373, %v614
        %v616 = vpop.f32.mrf.mxu0
        %v617 = vadd.f32 %v377, %v616
        %v618 = vpop.f32.mrf.mxu0
        %v619 = vadd.f32 %v373, %v618
        %v620 = vpop.f32.mrf.mxu0
        %v621 = vadd.f32 %v377, %v620
        %622 = vmatprep.mubr.bf16.mxu0 0
        %623 = vmatmul.mubr.bf16.gmra.mxu0 %v324
        %v624 = vpop.f32.mrf.mxu0
        %v625 = vadd.f32 %v373, %v624
        %v626 = vpop.f32.mrf.mxu0
        %v627 = vadd.f32 %v377, %v626
        %v628 = vpop.f32.mrf.mxu0
        %v629 = vadd.f32 %v373, %v628
        %v630 = vpop.f32.mrf.mxu0
        %v631 = vadd.f32 %v377, %v630
        %632 = vmatprep.mubr.bf16.mxu0 0
        %633 = vmatmul.mubr.bf16.gmra.mxu0 %v325
        %v634 = vpop.f32.mrf.mxu0
        %v635 = vadd.f32 %v373, %v634
        %v636 = vpop.f32.mrf.mxu0
        %v637 = vadd.f32 %v377, %v636
        %v638 = vpop.f32.mrf.mxu0
        %v639 = vadd.f32 %v373, %v638
        %v640 = vpop.f32.mrf.mxu0
        %v641 = vadd.f32 %v377, %v640
        %642 = vmatprep.mubr.bf16.mxu0 0
        %643 = vmatmul.mubr.bf16.gmra.mxu0 %v326
        %v644 = vpop.f32.mrf.mxu0
        %v645 = vadd.f32 %v373, %v644
        %v646 = vpop.f32.mrf.mxu0
        %v647 = vadd.f32 %v377, %v646
        %v648 = vpop.f32.mrf.mxu0
        %v649 = vadd.f32 %v373, %v648
        %v650 = vpop.f32.mrf.mxu0
        %v651 = vadd.f32 %v377, %v650
        %652 = vmatprep.mubr.bf16.mxu0 0
        %653 = vmatmul.mubr.bf16.gmra.mxu0 %v327
        %v654 = vpop.f32.mrf.mxu0
        %v655 = vadd.f32 %v373, %v654
        %v656 = vpop.f32.mrf.mxu0
        %v657 = vadd.f32 %v377, %v656
        %v658 = vpop.f32.mrf.mxu0
        %v659 = vadd.f32 %v373, %v658
        %v660 = vpop.f32.mrf.mxu0
        %v661 = vadd.f32 %v377, %v660
        %662 = vmatprep.mubr.bf16.mxu0 0
        %663 = vmatmul.mubr.bf16.gmra.mxu0 %v328
        %v664 = vpop.f32.mrf.mxu0
        %v665 = vadd.f32 %v373, %v664
        %v666 = vpop.f32.mrf.mxu0
        %v667 = vadd.f32 %v377, %v666
        %v668 = vpop.f32.mrf.mxu0
        %v669 = vadd.f32 %v373, %v668
        %v670 = vpop.f32.mrf.mxu0
        %v671 = vadd.f32 %v377, %v670
        %672 = vmatprep.mubr.bf16.mxu0 0
        %673 = vmatmul.mubr.bf16.gmra.mxu0 %v329
        %v674 = vpop.f32.mrf.mxu0
        %v675 = vadd.f32 %v373, %v674
        %v676 = vpop.f32.mrf.mxu0
        %v677 = vadd.f32 %v377, %v676
        %v678 = vpop.f32.mrf.mxu0
        %v679 = vadd.f32 %v373, %v678
        %v680 = vpop.f32.mrf.mxu0
        %v681 = vadd.f32 %v377, %v680
        %682 = vmatprep.mubr.bf16.mxu0 0
        %683 = vmatmul.mubr.bf16.gmra.mxu0 %v330
        %v684 = vpop.f32.mrf.mxu0
        %v685 = vadd.f32 %v373, %v684
        %v686 = vpop.f32.mrf.mxu0
        %v687 = vadd.f32 %v377, %v686
        %v688 = vpop.f32.mrf.mxu0
        %v689 = vadd.f32 %v373, %v688
        %v690 = vpop.f32.mrf.mxu0
        %v691 = vadd.f32 %v377, %v690
        %692 = vmatprep.mubr.bf16.mxu0 0
        %693 = vmatmul.mubr.bf16.gmra.mxu0 %v331
        %v694 = vpop.f32.mrf.mxu0
        %v695 = vadd.f32 %v373, %v694
        %v696 = vpop.f32.mrf.mxu0
        %v697 = vadd.f32 %v377, %v696
        %v698 = vpop.f32.mrf.mxu0
        %v699 = vadd.f32 %v373, %v698
        %v700 = vpop.f32.mrf.mxu0
        %v701 = vadd.f32 %v377, %v700
        %702 = vmatprep.mubr.bf16.mxu0 0
        %703 = vmatmul.mubr.bf16.gmra.mxu0 %v332
        %v704 = vpop.f32.mrf.mxu0
        %v705 = vadd.f32 %v373, %v704
        %v706 = vpop.f32.mrf.mxu0
        %v707 = vadd.f32 %v377, %v706
        %v708 = vpop.f32.mrf.mxu0
        %v709 = vadd.f32 %v373, %v708
        %v710 = vpop.f32.mrf.mxu0
        %v711 = vadd.f32 %v377, %v710
        %712 = vmatprep.mubr.bf16.mxu0 0
        %713 = vmatmul.mubr.bf16.gmra.mxu0 %v333
        %v714 = vpop.f32.mrf.mxu0
        %v715 = vadd.f32 %v373, %v714
        %v716 = vpop.f32.mrf.mxu0
        %v717 = vadd.f32 %v377, %v716
        %v718 = vpop.f32.mrf.mxu0
        %v719 = vadd.f32 %v373, %v718
        %v720 = vpop.f32.mrf.mxu0
        %v721 = vadd.f32 %v377, %v720
        %722 = vmatprep.mubr.bf16.mxu0 0
        %723 = vmatmul.mubr.bf16.gmra.mxu0 %v334
        %v724 = vpop.f32.mrf.mxu0
        %v725 = vadd.f32 %v373, %v724
        %v726 = vpop.f32.mrf.mxu0
        %v727 = vadd.f32 %v377, %v726
        %v728 = vpop.f32.mrf.mxu0
        %v729 = vadd.f32 %v373, %v728
        %v730 = vpop.f32.mrf.mxu0
        %v731 = vadd.f32 %v377, %v730
        %732 = vmatprep.mubr.bf16.mxu0 0
        %733 = vmatmul.mubr.bf16.gmra.mxu0 %v335
        %v734 = vpop.f32.mrf.mxu0
        %v735 = vadd.f32 %v373, %v734
        %v736 = vpop.f32.mrf.mxu0
        %v737 = vadd.f32 %v377, %v736
        %v738 = vpop.f32.mrf.mxu0
        %v739 = vadd.f32 %v373, %v738
        %v740 = vpop.f32.mrf.mxu0
        %v741 = vadd.f32 %v377, %v740
        %742 = vdwg.mxu0
        %743 = vmatprep.subr.bf16.mxu0 %v517
        %744 = vmatpush1.bf16.msra.mxu0 %v516
        %745 = vmatprep.subr.bf16.mxu0 %v513
        %746 = vmatpush1.bf16.msra.mxu0 %v512
        %747 = vmatprep.subr.bf16.mxu0 %v509
        %748 = vmatpush1.bf16.msra.mxu0 %v508
        %749 = vmatprep.subr.bf16.mxu0 %v505
        %750 = vmatpush1.bf16.msra.mxu0 %v504
        %751 = vmatprep.subr.bf16.mxu0 %v501
        %752 = vmatpush1.bf16.msra.mxu0 %v500
        %753 = vmatprep.subr.bf16.mxu0 %v497
        %754 = vmatpush1.bf16.msra.mxu0 %v496
        %755 = vmatprep.subr.bf16.mxu0 %v493
        %756 = vmatpush1.bf16.msra.mxu0 %v492
        %757 = vmatprep.subr.bf16.mxu0 %v489
        %758 = vmatpush1.bf16.msra.mxu0 %v488
        %759 = vmatprep.subr.bf16.mxu0 0
        %760 = vmatpush2.bf16.msra.mxu0 0
        %761 = vmatprep.subr.bf16.mxu0 0
        %762 = vmatpush2.bf16.msra.mxu0 0
        %763 = vmatprep.subr.bf16.mxu0 0
        %764 = vmatpush2.bf16.msra.mxu0 0
        %765 = vmatprep.subr.bf16.mxu0 0
        %766 = vmatpush2.bf16.msra.mxu0 0
        %767 = vmatprep.subr.bf16.mxu0 0
        %768 = vmatpush2.bf16.msra.mxu0 0
        %769 = vmatprep.subr.bf16.mxu0 0
        %770 = vmatpush2.bf16.msra.mxu0 0
        %771 = vmatprep.subr.bf16.mxu0 0
        %772 = vmatpush2.bf16.msra.mxu0 0
        %773 = vmatprep.subr.bf16.mxu0 0
        %774 = vmatpush2.bf16.msra.mxu0 0
        %775 = vmatprep.mubr.bf16.mxu0 0
        %776 = vmatmul.mubr.bf16.gmra.mxu0 %v320
        %v777 = vpop.f32.mrf.mxu0
        %v778 = vadd.f32 %v381, %v777
        %v779 = vpop.f32.mrf.mxu0
        %v780 = vadd.f32 %v385, %v779
        %v781 = vpop.f32.mrf.mxu0
        %v782 = vadd.f32 %v381, %v781
        %v783 = vpop.f32.mrf.mxu0
        %v784 = vadd.f32 %v385, %v783
        %785 = vmatprep.mubr.bf16.mxu0 0
        %786 = vmatmul.mubr.bf16.gmra.mxu0 %v321
        %v787 = vpop.f32.mrf.mxu0
        %v788 = vadd.f32 %v381, %v787
        %v789 = vpop.f32.mrf.mxu0
        %v790 = vadd.f32 %v385, %v789
        %v791 = vpop.f32.mrf.mxu0
        %v792 = vadd.f32 %v381, %v791
        %v793 = vpop.f32.mrf.mxu0
        %v794 = vadd.f32 %v385, %v793
        %795 = vmatprep.mubr.bf16.mxu0 0
        %796 = vmatmul.mubr.bf16.gmra.mxu0 %v322
        %v797 = vpop.f32.mrf.mxu0
        %v798 = vadd.f32 %v381, %v797
        %v799 = vpop.f32.mrf.mxu0
        %v800 = vadd.f32 %v385, %v799
        %v801 = vpop.f32.mrf.mxu0
        %v802 = vadd.f32 %v381, %v801
        %v803 = vpop.f32.mrf.mxu0
        %v804 = vadd.f32 %v385, %v803
        %805 = vmatprep.mubr.bf16.mxu0 0
        %806 = vmatmul.mubr.bf16.gmra.mxu0 %v323
        %v807 = vpop.f32.mrf.mxu0
        %v808 = vadd.f32 %v381, %v807
        %v809 = vpop.f32.mrf.mxu0
        %v810 = vadd.f32 %v385, %v809
        %v811 = vpop.f32.mrf.mxu0
        %v812 = vadd.f32 %v381, %v811
        %v813 = vpop.f32.mrf.mxu0
        %v814 = vadd.f32 %v385, %v813
        %815 = vmatprep.mubr.bf16.mxu0 0
        %816 = vmatmul.mubr.bf16.gmra.mxu0 %v324
        %v817 = vpop.f32.mrf.mxu0
        %v818 = vadd.f32 %v381, %v817
        %v819 = vpop.f32.mrf.mxu0
        %v820 = vadd.f32 %v385, %v819
        %v821 = vpop.f32.mrf.mxu0
        %v822 = vadd.f32 %v381, %v821
        %v823 = vpop.f32.mrf.mxu0
        %v824 = vadd.f32 %v385, %v823
        %825 = vmatprep.mubr.bf16.mxu0 0
        %826 = vmatmul.mubr.bf16.gmra.mxu0 %v325
        %v827 = vpop.f32.mrf.mxu0
        %v828 = vadd.f32 %v381, %v827
        %v829 = vpop.f32.mrf.mxu0
        %v830 = vadd.f32 %v385, %v829
        %v831 = vpop.f32.mrf.mxu0
        %v832 = vadd.f32 %v381, %v831
        %v833 = vpop.f32.mrf.mxu0
        %v834 = vadd.f32 %v385, %v833
        %835 = vmatprep.mubr.bf16.mxu0 0
        %836 = vmatmul.mubr.bf16.gmra.mxu0 %v326
        %v837 = vpop.f32.mrf.mxu0
        %v838 = vadd.f32 %v381, %v837
        %v839 = vpop.f32.mrf.mxu0
        %v840 = vadd.f32 %v385, %v839
        %v841 = vpop.f32.mrf.mxu0
        %v842 = vadd.f32 %v381, %v841
        %v843 = vpop.f32.mrf.mxu0
        %v844 = vadd.f32 %v385, %v843
        %845 = vmatprep.mubr.bf16.mxu0 0
        %846 = vmatmul.mubr.bf16.gmra.mxu0 %v327
        %v847 = vpop.f32.mrf.mxu0
        %v848 = vadd.f32 %v381, %v847
        %v849 = vpop.f32.mrf.mxu0
        %v850 = vadd.f32 %v385, %v849
        %v851 = vpop.f32.mrf.mxu0
        %v852 = vadd.f32 %v381, %v851
        %v853 = vpop.f32.mrf.mxu0
        %v854 = vadd.f32 %v385, %v853
        %855 = vmatprep.mubr.bf16.mxu0 0
        %856 = vmatmul.mubr.bf16.gmra.mxu0 %v328
        %v857 = vpop.f32.mrf.mxu0
        %v858 = vadd.f32 %v381, %v857
        %v859 = vpop.f32.mrf.mxu0
        %v860 = vadd.f32 %v385, %v859
        %v861 = vpop.f32.mrf.mxu0
        %v862 = vadd.f32 %v381, %v861
        %v863 = vpop.f32.mrf.mxu0
        %v864 = vadd.f32 %v385, %v863
        %865 = vmatprep.mubr.bf16.mxu0 0
        %866 = vmatmul.mubr.bf16.gmra.mxu0 %v329
        %v867 = vpop.f32.mrf.mxu0
        %v868 = vadd.f32 %v381, %v867
        %v869 = vpop.f32.mrf.mxu0
        %v870 = vadd.f32 %v385, %v869
        %v871 = vpop.f32.mrf.mxu0
        %v872 = vadd.f32 %v381, %v871
        %v873 = vpop.f32.mrf.mxu0
        %v874 = vadd.f32 %v385, %v873
        %875 = vmatprep.mubr.bf16.mxu0 0
        %876 = vmatmul.mubr.bf16.gmra.mxu0 %v330
        %v877 = vpop.f32.mrf.mxu0
        %v878 = vadd.f32 %v381, %v877
        %v879 = vpop.f32.mrf.mxu0
        %v880 = vadd.f32 %v385, %v879
        %v881 = vpop.f32.mrf.mxu0
        %v882 = vadd.f32 %v381, %v881
        %v883 = vpop.f32.mrf.mxu0
        %v884 = vadd.f32 %v385, %v883
        %885 = vmatprep.mubr.bf16.mxu0 0
        %886 = vmatmul.mubr.bf16.gmra.mxu0 %v331
        %v887 = vpop.f32.mrf.mxu0
        %v888 = vadd.f32 %v381, %v887
        %v889 = vpop.f32.mrf.mxu0
        %v890 = vadd.f32 %v385, %v889
        %v891 = vpop.f32.mrf.mxu0
        %v892 = vadd.f32 %v381, %v891
        %v893 = vpop.f32.mrf.mxu0
        %v894 = vadd.f32 %v385, %v893
        %895 = vmatprep.mubr.bf16.mxu0 0
        %896 = vmatmul.mubr.bf16.gmra.mxu0 %v332
        %v897 = vpop.f32.mrf.mxu0
        %v898 = vadd.f32 %v381, %v897
        %v899 = vpop.f32.mrf.mxu0
        %v900 = vadd.f32 %v385, %v899
        %v901 = vpop.f32.mrf.mxu0
        %v902 = vadd.f32 %v381, %v901
        %v903 = vpop.f32.mrf.mxu0
        %v904 = vadd.f32 %v385, %v903
        %905 = vmatprep.mubr.bf16.mxu0 0
        %906 = vmatmul.mubr.bf16.gmra.mxu0 %v333
        %v907 = vpop.f32.mrf.mxu0
        %v908 = vadd.f32 %v381, %v907
        %v909 = vpop.f32.mrf.mxu0
        %v910 = vadd.f32 %v385, %v909
        %v911 = vpop.f32.mrf.mxu0
        %v912 = vadd.f32 %v381, %v911
        %v913 = vpop.f32.mrf.mxu0
        %v914 = vadd.f32 %v385, %v913
        %915 = vmatprep.mubr.bf16.mxu0 0
        %916 = vmatmul.mubr.bf16.gmra.mxu0 %v334
        %v917 = vpop.f32.mrf.mxu0
        %v918 = vadd.f32 %v381, %v917
        %v919 = vpop.f32.mrf.mxu0
        %v920 = vadd.f32 %v385, %v919
        %v921 = vpop.f32.mrf.mxu0
        %v922 = vadd.f32 %v381, %v921
        %v923 = vpop.f32.mrf.mxu0
        %v924 = vadd.f32 %v385, %v923
        %925 = vmatprep.mubr.bf16.mxu0 0
        %926 = vmatmul.mubr.bf16.gmra.mxu0 %v335
        %v927 = vpop.f32.mrf.mxu0
        %v928 = vadd.f32 %v381, %v927
        %v929 = vpop.f32.mrf.mxu0
        %v930 = vadd.f32 %v385, %v929
        %v931 = vpop.f32.mrf.mxu0
        %v932 = vadd.f32 %v381, %v931
        %v933 = vpop.f32.mrf.mxu0
        %v934 = vadd.f32 %v385, %v933
        %935 = vdwg.mxu0
        %v936 = vxor.u32 %v585, 2147483648
        %v937 = vxor.u32 %v587, 2147483648
        %v938 = vxor.u32 %v589, 2147483648
        %v939 = vxor.u32 %v591, 2147483648
        %v940 = vxor.u32 %v595, 2147483648
        %v941 = vxor.u32 %v597, 2147483648
        %v942 = vxor.u32 %v599, 2147483648
        %v943 = vxor.u32 %v601, 2147483648
        %v944 = vxor.u32 %v605, 2147483648
        %v945 = vxor.u32 %v607, 2147483648
        %v946 = vxor.u32 %v609, 2147483648
        %v947 = vxor.u32 %v611, 2147483648
        %v948 = vxor.u32 %v615, 2147483648
        %v949 = vxor.u32 %v617, 2147483648
        %v950 = vxor.u32 %v619, 2147483648
        %v951 = vxor.u32 %v621, 2147483648
        %v952 = vxor.u32 %v625, 2147483648
        %v953 = vxor.u32 %v627, 2147483648
        %v954 = vxor.u32 %v629, 2147483648
        %v955 = vxor.u32 %v631, 2147483648
        %v956 = vxor.u32 %v635, 2147483648
        %v957 = vxor.u32 %v637, 2147483648
        %v958 = vxor.u32 %v639, 2147483648
        %v959 = vxor.u32 %v641, 2147483648
        %v960 = vxor.u32 %v645, 2147483648
        %v961 = vxor.u32 %v647, 2147483648
        %v962 = vxor.u32 %v649, 2147483648
        %v963 = vxor.u32 %v651, 2147483648
        %v964 = vxor.u32 %v655, 2147483648
        %v965 = vxor.u32 %v657, 2147483648
        %v966 = vxor.u32 %v659, 2147483648
        %v967 = vxor.u32 %v661, 2147483648
        %v968 = vxor.u32 %v665, 2147483648
        %v969 = vxor.u32 %v667, 2147483648
        %v970 = vxor.u32 %v669, 2147483648
        %v971 = vxor.u32 %v671, 2147483648
        %v972 = vxor.u32 %v675, 2147483648
        %v973 = vxor.u32 %v677, 2147483648
        %v974 = vxor.u32 %v679, 2147483648
        %v975 = vxor.u32 %v681, 2147483648
        %v976 = vxor.u32 %v685, 2147483648
        %v977 = vxor.u32 %v687, 2147483648
        %v978 = vxor.u32 %v689, 2147483648
        %v979 = vxor.u32 %v691, 2147483648
        %v980 = vxor.u32 %v695, 2147483648
        %v981 = vxor.u32 %v697, 2147483648
        %v982 = vxor.u32 %v699, 2147483648
        %v983 = vxor.u32 %v701, 2147483648
        %v984 = vxor.u32 %v705, 2147483648
        %v985 = vxor.u32 %v707, 2147483648
        %v986 = vxor.u32 %v709, 2147483648
        %v987 = vxor.u32 %v711, 2147483648
        %v988 = vxor.u32 %v715, 2147483648
        %v989 = vxor.u32 %v717, 2147483648
        %v990 = vxor.u32 %v719, 2147483648
        %v991 = vxor.u32 %v721, 2147483648
        %v992 = vxor.u32 %v725, 2147483648
        %v993 = vxor.u32 %v727, 2147483648
        %v994 = vxor.u32 %v729, 2147483648
        %v995 = vxor.u32 %v731, 2147483648
        %v996 = vxor.u32 %v735, 2147483648
        %v997 = vxor.u32 %v737, 2147483648
        %v998 = vxor.u32 %v739, 2147483648
        %v999 = vxor.u32 %v741, 2147483648
        %v1000 = vmul.f32 %v936, 1.442695
        %v1001 = vpow.pop %v1000
        %v1002 = vmul.f32 %v937, 1.442695
        %v1003 = vpow.pop %v1002
        %v1004 = vmul.f32 %v938, 1.442695
        %v1005 = vpow.pop %v1004
        %v1006 = vmul.f32 %v939, 1.442695
        %v1007 = vpow.pop %v1006
        %v1008 = vmul.f32 %v940, 1.442695
        %v1009 = vpow.pop %v1008
        %v1010 = vmul.f32 %v941, 1.442695
        %v1011 = vpow.pop %v1010
        %v1012 = vmul.f32 %v942, 1.442695
        %v1013 = vpow.pop %v1012
        %v1014 = vmul.f32 %v943, 1.442695
        %v1015 = vpow.pop %v1014
        %v1016 = vmul.f32 %v944, 1.442695
        %v1017 = vpow.pop %v1016
        %v1018 = vmul.f32 %v945, 1.442695
        %v1019 = vpow.pop %v1018
        %v1020 = vmul.f32 %v946, 1.442695
        %v1021 = vpow.pop %v1020
        %v1022 = vmul.f32 %v947, 1.442695
        %v1023 = vpow.pop %v1022
        %v1024 = vmul.f32 %v948, 1.442695
        %v1025 = vpow.pop %v1024
        %v1026 = vmul.f32 %v949, 1.442695
        %v1027 = vpow.pop %v1026
        %v1028 = vmul.f32 %v950, 1.442695
        %v1029 = vpow.pop %v1028
        %v1030 = vmul.f32 %v951, 1.442695
        %v1031 = vpow.pop %v1030
        %v1032 = vmul.f32 %v952, 1.442695
        %v1033 = vpow.pop %v1032
        %v1034 = vmul.f32 %v953, 1.442695
        %v1035 = vpow.pop %v1034
        %v1036 = vmul.f32 %v954, 1.442695
        %v1037 = vpow.pop %v1036
        %v1038 = vmul.f32 %v955, 1.442695
        %v1039 = vpow.pop %v1038
        %v1040 = vmul.f32 %v956, 1.442695
        %v1041 = vpow.pop %v1040
        %v1042 = vmul.f32 %v957, 1.442695
        %v1043 = vpow.pop %v1042
        %v1044 = vmul.f32 %v958, 1.442695
        %v1045 = vpow.pop %v1044
        %v1046 = vmul.f32 %v959, 1.442695
        %v1047 = vpow.pop %v1046
        %v1048 = vmul.f32 %v960, 1.442695
        %v1049 = vpow.pop %v1048
        %v1050 = vmul.f32 %v961, 1.442695
        %v1051 = vpow.pop %v1050
        %v1052 = vmul.f32 %v962, 1.442695
        %v1053 = vpow.pop %v1052
        %v1054 = vmul.f32 %v963, 1.442695
        %v1055 = vpow.pop %v1054
        %v1056 = vmul.f32 %v964, 1.442695
        %v1057 = vpow.pop %v1056
        %v1058 = vmul.f32 %v965, 1.442695
        %v1059 = vpow.pop %v1058
        %v1060 = vmul.f32 %v966, 1.442695
        %v1061 = vpow.pop %v1060
        %v1062 = vmul.f32 %v967, 1.442695
        %v1063 = vpow.pop %v1062
        %v1064 = vmul.f32 %v968, 1.442695
        %v1065 = vpow.pop %v1064
        %v1066 = vmul.f32 %v969, 1.442695
        %v1067 = vpow.pop %v1066
        %v1068 = vmul.f32 %v970, 1.442695
        %v1069 = vpow.pop %v1068
        %v1070 = vmul.f32 %v971, 1.442695
        %v1071 = vpow.pop %v1070
        %v1072 = vmul.f32 %v972, 1.442695
        %v1073 = vpow.pop %v1072
        %v1074 = vmul.f32 %v973, 1.442695
        %v1075 = vpow.pop %v1074
        %v1076 = vmul.f32 %v974, 1.442695
        %v1077 = vpow.pop %v1076
        %v1078 = vmul.f32 %v975, 1.442695
        %v1079 = vpow.pop %v1078
        %v1080 = vmul.f32 %v976, 1.442695
        %v1081 = vpow.pop %v1080
        %v1082 = vmul.f32 %v977, 1.442695
        %v1083 = vpow.pop %v1082
        %v1084 = vmul.f32 %v978, 1.442695
        %v1085 = vpow.pop %v1084
        %v1086 = vmul.f32 %v979, 1.442695
        %v1087 = vpow.pop %v1086
        %v1088 = vmul.f32 %v980, 1.442695
        %v1089 = vpow.pop %v1088
        %v1090 = vmul.f32 %v981, 1.442695
        %v1091 = vpow.pop %v1090
        %v1092 = vmul.f32 %v982, 1.442695
        %v1093 = vpow.pop %v1092
        %v1094 = vmul.f32 %v983, 1.442695
        %v1095 = vpow.pop %v1094
        %v1096 = vmul.f32 %v984, 1.442695
        %v1097 = vpow.pop %v1096
        %v1098 = vmul.f32 %v985, 1.442695
        %v1099 = vpow.pop %v1098
        %v1100 = vmul.f32 %v986, 1.442695
        %v1101 = vpow.pop %v1100
        %v1102 = vmul.f32 %v987, 1.442695
        %v1103 = vpow.pop %v1102
        %v1104 = vmul.f32 %v988, 1.442695
        %v1105 = vpow.pop %v1104
        %v1106 = vmul.f32 %v989, 1.442695
        %v1107 = vpow.pop %v1106
        %v1108 = vmul.f32 %v990, 1.442695
        %v1109 = vpow.pop %v1108
        %v1110 = vmul.f32 %v991, 1.442695
        %v1111 = vpow.pop %v1110
        %v1112 = vmul.f32 %v992, 1.442695
        %v1113 = vpow.pop %v1112
        %v1114 = vmul.f32 %v993, 1.442695
        %v1115 = vpow.pop %v1114
        %v1116 = vmul.f32 %v994, 1.442695
        %v1117 = vpow.pop %v1116
        %v1118 = vmul.f32 %v995, 1.442695
        %v1119 = vpow.pop %v1118
        %v1120 = vmul.f32 %v996, 1.442695
        %v1121 = vpow.pop %v1120
        %v1122 = vmul.f32 %v997, 1.442695
        %v1123 = vpow.pop %v1122
        %v1124 = vmul.f32 %v998, 1.442695
        %v1125 = vpow.pop %v1124
        %v1126 = vmul.f32 %v999, 1.442695
        %v1127 = vpow.pop %v1126
        %v1128 = vadd.f32 %v1001, 1.0
        %v1129 = vadd.f32 %v1003, 1.0
        %v1130 = vadd.f32 %v1005, 1.0
        %v1131 = vadd.f32 %v1007, 1.0
        %v1132 = vadd.f32 %v1009, 1.0
        %v1133 = vadd.f32 %v1011, 1.0
        %v1134 = vadd.f32 %v1013, 1.0
        %v1135 = vadd.f32 %v1015, 1.0
        %v1136 = vadd.f32 %v1017, 1.0
        %v1137 = vadd.f32 %v1019, 1.0
        %v1138 = vadd.f32 %v1021, 1.0
        %v1139 = vadd.f32 %v1023, 1.0
        %v1140 = vadd.f32 %v1025, 1.0
        %v1141 = vadd.f32 %v1027, 1.0
        %v1142 = vadd.f32 %v1029, 1.0
        %v1143 = vadd.f32 %v1031, 1.0
        %v1144 = vadd.f32 %v1033, 1.0
        %v1145 = vadd.f32 %v1035, 1.0
        %v1146 = vadd.f32 %v1037, 1.0
        %v1147 = vadd.f32 %v1039, 1.0
        %v1148 = vadd.f32 %v1041, 1.0
        %v1149 = vadd.f32 %v1043, 1.0
        %v1150 = vadd.f32 %v1045, 1.0
        %v1151 = vadd.f32 %v1047, 1.0
        %v1152 = vadd.f32 %v1049, 1.0
        %v1153 = vadd.f32 %v1051, 1.0
        %v1154 = vadd.f32 %v1053, 1.0
        %v1155 = vadd.f32 %v1055, 1.0
        %v1156 = vadd.f32 %v1057, 1.0
        %v1157 = vadd.f32 %v1059, 1.0
        %v1158 = vadd.f32 %v1061, 1.0
        %v1159 = vadd.f32 %v1063, 1.0
        %v1160 = vadd.f32 %v1065, 1.0
        %v1161 = vadd.f32 %v1067, 1.0
        %v1162 = vadd.f32 %v1069, 1.0
        %v1163 = vadd.f32 %v1071, 1.0
        %v1164 = vadd.f32 %v1073, 1.0
        %v1165 = vadd.f32 %v1075, 1.0
        %v1166 = vadd.f32 %v1077, 1.0
        %v1167 = vadd.f32 %v1079, 1.0
        %v1168 = vadd.f32 %v1081, 1.0
        %v1169 = vadd.f32 %v1083, 1.0
        %v1170 = vadd.f32 %v1085, 1.0
        %v1171 = vadd.f32 %v1087, 1.0
        %v1172 = vadd.f32 %v1089, 1.0
        %v1173 = vadd.f32 %v1091, 1.0
        %v1174 = vadd.f32 %v1093, 1.0
        %v1175 = vadd.f32 %v1095, 1.0
        %v1176 = vadd.f32 %v1097, 1.0
        %v1177 = vadd.f32 %v1099, 1.0
        %v1178 = vadd.f32 %v1101, 1.0
        %v1179 = vadd.f32 %v1103, 1.0
        %v1180 = vadd.f32 %v1105, 1.0
        %v1181 = vadd.f32 %v1107, 1.0
        %v1182 = vadd.f32 %v1109, 1.0
        %v1183 = vadd.f32 %v1111, 1.0
        %v1184 = vadd.f32 %v1113, 1.0
        %v1185 = vadd.f32 %v1115, 1.0
        %v1186 = vadd.f32 %v1117, 1.0
        %v1187 = vadd.f32 %v1119, 1.0
        %v1188 = vadd.f32 %v1121, 1.0
        %v1189 = vadd.f32 %v1123, 1.0
        %v1190 = vadd.f32 %v1125, 1.0
        %v1191 = vadd.f32 %v1127, 1.0
        %v1192 = vrcp.pop %v1128
        %v1193 = vmul.f32 1.0, %v1192
        %v1194 = vrcp.pop %v1129
        %v1195 = vmul.f32 1.0, %v1194
        %v1196 = vrcp.pop %v1130
        %v1197 = vmul.f32 1.0, %v1196
        %v1198 = vrcp.pop %v1131
        %v1199 = vmul.f32 1.0, %v1198
        %v1200 = vrcp.pop %v1132
        %v1201 = vmul.f32 1.0, %v1200
        %v1202 = vrcp.pop %v1133
        %v1203 = vmul.f32 1.0, %v1202
        %v1204 = vrcp.pop %v1134
        %v1205 = vmul.f32 1.0, %v1204
        %v1206 = vrcp.pop %v1135
        %v1207 = vmul.f32 1.0, %v1206
        %v1208 = vrcp.pop %v1136
        %v1209 = vmul.f32 1.0, %v1208
        %v1210 = vrcp.pop %v1137
        %v1211 = vmul.f32 1.0, %v1210
        %v1212 = vrcp.pop %v1138
        %v1213 = vmul.f32 1.0, %v1212
        %v1214 = vrcp.pop %v1139
        %v1215 = vmul.f32 1.0, %v1214
        %v1216 = vrcp.pop %v1140
        %v1217 = vmul.f32 1.0, %v1216
        %v1218 = vrcp.pop %v1141
        %v1219 = vmul.f32 1.0, %v1218
        %v1220 = vrcp.pop %v1142
        %v1221 = vmul.f32 1.0, %v1220
        %v1222 = vrcp.pop %v1143
        %v1223 = vmul.f32 1.0, %v1222
        %v1224 = vrcp.pop %v1144
        %v1225 = vmul.f32 1.0, %v1224
        %v1226 = vrcp.pop %v1145
        %v1227 = vmul.f32 1.0, %v1226
        %v1228 = vrcp.pop %v1146
        %v1229 = vmul.f32 1.0, %v1228
        %v1230 = vrcp.pop %v1147
        %v1231 = vmul.f32 1.0, %v1230
        %v1232 = vrcp.pop %v1148
        %v1233 = vmul.f32 1.0, %v1232
        %v1234 = vrcp.pop %v1149
        %v1235 = vmul.f32 1.0, %v1234
        %v1236 = vrcp.pop %v1150
        %v1237 = vmul.f32 1.0, %v1236
        %v1238 = vrcp.pop %v1151
        %v1239 = vmul.f32 1.0, %v1238
        %v1240 = vrcp.pop %v1152
        %v1241 = vmul.f32 1.0, %v1240
        %v1242 = vrcp.pop %v1153
        %v1243 = vmul.f32 1.0, %v1242
        %v1244 = vrcp.pop %v1154
        %v1245 = vmul.f32 1.0, %v1244
        %v1246 = vrcp.pop %v1155
        %v1247 = vmul.f32 1.0, %v1246
        %v1248 = vrcp.pop %v1156
        %v1249 = vmul.f32 1.0, %v1248
        %v1250 = vrcp.pop %v1157
        %v1251 = vmul.f32 1.0, %v1250
        %v1252 = vrcp.pop %v1158
        %v1253 = vmul.f32 1.0, %v1252
        %v1254 = vrcp.pop %v1159
        %v1255 = vmul.f32 1.0, %v1254
        %v1256 = vrcp.pop %v1160
        %v1257 = vmul.f32 1.0, %v1256
        %v1258 = vrcp.pop %v1161
        %v1259 = vmul.f32 1.0, %v1258
        %v1260 = vrcp.pop %v1162
        %v1261 = vmul.f32 1.0, %v1260
        %v1262 = vrcp.pop %v1163
        %v1263 = vmul.f32 1.0, %v1262
        %v1264 = vrcp.pop %v1164
        %v1265 = vmul.f32 1.0, %v1264
        %v1266 = vrcp.pop %v1165
        %v1267 = vmul.f32 1.0, %v1266
        %v1268 = vrcp.pop %v1166
        %v1269 = vmul.f32 1.0, %v1268
        %v1270 = vrcp.pop %v1167
        %v1271 = vmul.f32 1.0, %v1270
        %v1272 = vrcp.pop %v1168
        %v1273 = vmul.f32 1.0, %v1272
        %v1274 = vrcp.pop %v1169
        %v1275 = vmul.f32 1.0, %v1274
        %v1276 = vrcp.pop %v1170
        %v1277 = vmul.f32 1.0, %v1276
        %v1278 = vrcp.pop %v1171
        %v1279 = vmul.f32 1.0, %v1278
        %v1280 = vrcp.pop %v1172
        %v1281 = vmul.f32 1.0, %v1280
        %v1282 = vrcp.pop %v1173
        %v1283 = vmul.f32 1.0, %v1282
        %v1284 = vrcp.pop %v1174
        %v1285 = vmul.f32 1.0, %v1284
        %v1286 = vrcp.pop %v1175
        %v1287 = vmul.f32 1.0, %v1286
        %v1288 = vrcp.pop %v1176
        %v1289 = vmul.f32 1.0, %v1288
        %v1290 = vrcp.pop %v1177
        %v1291 = vmul.f32 1.0, %v1290
        %v1292 = vrcp.pop %v1178
        %v1293 = vmul.f32 1.0, %v1292
        %v1294 = vrcp.pop %v1179
        %v1295 = vmul.f32 1.0, %v1294
        %v1296 = vrcp.pop %v1180
        %v1297 = vmul.f32 1.0, %v1296
        %v1298 = vrcp.pop %v1181
        %v1299 = vmul.f32 1.0, %v1298
        %v1300 = vrcp.pop %v1182
        %v1301 = vmul.f32 1.0, %v1300
        %v1302 = vrcp.pop %v1183
        %v1303 = vmul.f32 1.0, %v1302
        %v1304 = vrcp.pop %v1184
        %v1305 = vmul.f32 1.0, %v1304
        %v1306 = vrcp.pop %v1185
        %v1307 = vmul.f32 1.0, %v1306
        %v1308 = vrcp.pop %v1186
        %v1309 = vmul.f32 1.0, %v1308
        %v1310 = vrcp.pop %v1187
        %v1311 = vmul.f32 1.0, %v1310
        %v1312 = vrcp.pop %v1188
        %v1313 = vmul.f32 1.0, %v1312
        %v1314 = vrcp.pop %v1189
        %v1315 = vmul.f32 1.0, %v1314
        %v1316 = vrcp.pop %v1190
        %v1317 = vmul.f32 1.0, %v1316
        %v1318 = vrcp.pop %v1191
        %v1319 = vmul.f32 1.0, %v1318
        %v1320 = vmul.f32 %v585, %v1193
        %v1321 = vmul.f32 %v587, %v1195
        %v1322 = vmul.f32 %v589, %v1197
        %v1323 = vmul.f32 %v591, %v1199
        %v1324 = vmul.f32 %v595, %v1201
        %v1325 = vmul.f32 %v597, %v1203
        %v1326 = vmul.f32 %v599, %v1205
        %v1327 = vmul.f32 %v601, %v1207
        %v1328 = vmul.f32 %v605, %v1209
        %v1329 = vmul.f32 %v607, %v1211
        %v1330 = vmul.f32 %v609, %v1213
        %v1331 = vmul.f32 %v611, %v1215
        %v1332 = vmul.f32 %v615, %v1217
        %v1333 = vmul.f32 %v617, %v1219
        %v1334 = vmul.f32 %v619, %v1221
        %v1335 = vmul.f32 %v621, %v1223
        %v1336 = vmul.f32 %v625, %v1225
        %v1337 = vmul.f32 %v627, %v1227
        %v1338 = vmul.f32 %v629, %v1229
        %v1339 = vmul.f32 %v631, %v1231
        %v1340 = vmul.f32 %v635, %v1233
        %v1341 = vmul.f32 %v637, %v1235
        %v1342 = vmul.f32 %v639, %v1237
        %v1343 = vmul.f32 %v641, %v1239
        %v1344 = vmul.f32 %v645, %v1241
        %v1345 = vmul.f32 %v647, %v1243
        %v1346 = vmul.f32 %v649, %v1245
        %v1347 = vmul.f32 %v651, %v1247
        %v1348 = vmul.f32 %v655, %v1249
        %v1349 = vmul.f32 %v657, %v1251
        %v1350 = vmul.f32 %v659, %v1253
        %v1351 = vmul.f32 %v661, %v1255
        %v1352 = vmul.f32 %v665, %v1257
        %v1353 = vmul.f32 %v667, %v1259
        %v1354 = vmul.f32 %v669, %v1261
        %v1355 = vmul.f32 %v671, %v1263
        %v1356 = vmul.f32 %v675, %v1265
        %v1357 = vmul.f32 %v677, %v1267
        %v1358 = vmul.f32 %v679, %v1269
        %v1359 = vmul.f32 %v681, %v1271
        %v1360 = vmul.f32 %v685, %v1273
        %v1361 = vmul.f32 %v687, %v1275
        %v1362 = vmul.f32 %v689, %v1277
        %v1363 = vmul.f32 %v691, %v1279
        %v1364 = vmul.f32 %v695, %v1281
        %v1365 = vmul.f32 %v697, %v1283
        %v1366 = vmul.f32 %v699, %v1285
        %v1367 = vmul.f32 %v701, %v1287
        %v1368 = vmul.f32 %v705, %v1289
        %v1369 = vmul.f32 %v707, %v1291
        %v1370 = vmul.f32 %v709, %v1293
        %v1371 = vmul.f32 %v711, %v1295
        %v1372 = vmul.f32 %v715, %v1297
        %v1373 = vmul.f32 %v717, %v1299
        %v1374 = vmul.f32 %v719, %v1301
        %v1375 = vmul.f32 %v721, %v1303
        %v1376 = vmul.f32 %v725, %v1305
        %v1377 = vmul.f32 %v727, %v1307
        %v1378 = vmul.f32 %v729, %v1309
        %v1379 = vmul.f32 %v731, %v1311
        %v1380 = vmul.f32 %v735, %v1313
        %v1381 = vmul.f32 %v737, %v1315
        %v1382 = vmul.f32 %v739, %v1317
        %v1383 = vmul.f32 %v741, %v1319
        %v1384 = vmul.f32 %v1320, %v778
        %v1385 = vmul.f32 %v1321, %v780
        %v1386 = vmul.f32 %v1322, %v782
        %v1387 = vmul.f32 %v1323, %v784
        %v1388 = vmul.f32 %v1324, %v788
        %v1389 = vmul.f32 %v1325, %v790
        %v1390 = vmul.f32 %v1326, %v792
        %v1391 = vmul.f32 %v1327, %v794
        %v1392 = vmul.f32 %v1328, %v798
        %v1393 = vmul.f32 %v1329, %v800
        %v1394 = vmul.f32 %v1330, %v802
        %v1395 = vmul.f32 %v1331, %v804
        %v1396 = vmul.f32 %v1332, %v808
        %v1397 = vmul.f32 %v1333, %v810
        %v1398 = vmul.f32 %v1334, %v812
        %v1399 = vmul.f32 %v1335, %v814
        %v1400 = vmul.f32 %v1336, %v818
        %v1401 = vmul.f32 %v1337, %v820
        %v1402 = vmul.f32 %v1338, %v822
        %v1403 = vmul.f32 %v1339, %v824
        %v1404 = vmul.f32 %v1340, %v828
        %v1405 = vmul.f32 %v1341, %v830
        %v1406 = vmul.f32 %v1342, %v832
        %v1407 = vmul.f32 %v1343, %v834
        %v1408 = vmul.f32 %v1344, %v838
        %v1409 = vmul.f32 %v1345, %v840
        %v1410 = vmul.f32 %v1346, %v842
        %v1411 = vmul.f32 %v1347, %v844
        %v1412 = vmul.f32 %v1348, %v848
        %v1413 = vmul.f32 %v1349, %v850
        %v1414 = vmul.f32 %v1350, %v852
        %v1415 = vmul.f32 %v1351, %v854
        %v1416 = vmul.f32 %v1352, %v858
        %v1417 = vmul.f32 %v1353, %v860
        %v1418 = vmul.f32 %v1354, %v862
        %v1419 = vmul.f32 %v1355, %v864
        %v1420 = vmul.f32 %v1356, %v868
        %v1421 = vmul.f32 %v1357, %v870
        %v1422 = vmul.f32 %v1358, %v872
        %v1423 = vmul.f32 %v1359, %v874
        %v1424 = vmul.f32 %v1360, %v878
        %v1425 = vmul.f32 %v1361, %v880
        %v1426 = vmul.f32 %v1362, %v882
        %v1427 = vmul.f32 %v1363, %v884
        %v1428 = vmul.f32 %v1364, %v888
        %v1429 = vmul.f32 %v1365, %v890
        %v1430 = vmul.f32 %v1366, %v892
        %v1431 = vmul.f32 %v1367, %v894
        %v1432 = vmul.f32 %v1368, %v898
        %v1433 = vmul.f32 %v1369, %v900
        %v1434 = vmul.f32 %v1370, %v902
        %v1435 = vmul.f32 %v1371, %v904
        %v1436 = vmul.f32 %v1372, %v908
        %v1437 = vmul.f32 %v1373, %v910
        %v1438 = vmul.f32 %v1374, %v912
        %v1439 = vmul.f32 %v1375, %v914
        %v1440 = vmul.f32 %v1376, %v918
        %v1441 = vmul.f32 %v1377, %v920
        %v1442 = vmul.f32 %v1378, %v922
        %v1443 = vmul.f32 %v1379, %v924
        %v1444 = vmul.f32 %v1380, %v928
        %v1445 = vmul.f32 %v1381, %v930
        %v1446 = vmul.f32 %v1382, %v932
        %v1447 = vmul.f32 %v1383, %v934
        %v1448 = vpack.c.bf16 %v1386, %v1384
        %v1449 = vpack.c.bf16 %v1387, %v1385
        %v1450 = vpack.c.bf16 %v1390, %v1388
        %v1451 = vpack.c.bf16 %v1391, %v1389
        %v1452 = vpack.c.bf16 %v1394, %v1392
        %v1453 = vpack.c.bf16 %v1395, %v1393
        %v1454 = vpack.c.bf16 %v1398, %v1396
        %v1455 = vpack.c.bf16 %v1399, %v1397
        %v1456 = vpack.c.bf16 %v1402, %v1400
        %v1457 = vpack.c.bf16 %v1403, %v1401
        %v1458 = vpack.c.bf16 %v1406, %v1404
        %v1459 = vpack.c.bf16 %v1407, %v1405
        %v1460 = vpack.c.bf16 %v1410, %v1408
        %v1461 = vpack.c.bf16 %v1411, %v1409
        %v1462 = vpack.c.bf16 %v1414, %v1412
        %v1463 = vpack.c.bf16 %v1415, %v1413
        %v1464 = vpack.c.bf16 %v1418, %v1416
        %v1465 = vpack.c.bf16 %v1419, %v1417
        %v1466 = vpack.c.bf16 %v1422, %v1420
        %v1467 = vpack.c.bf16 %v1423, %v1421
        %v1468 = vpack.c.bf16 %v1426, %v1424
        %v1469 = vpack.c.bf16 %v1427, %v1425
        %v1470 = vpack.c.bf16 %v1430, %v1428
        %v1471 = vpack.c.bf16 %v1431, %v1429
        %v1472 = vpack.c.bf16 %v1434, %v1432
        %v1473 = vpack.c.bf16 %v1435, %v1433
        %v1474 = vpack.c.bf16 %v1438, %v1436
        %v1475 = vpack.c.bf16 %v1439, %v1437
        %v1476 = vpack.c.bf16 %v1442, %v1440
        %v1477 = vpack.c.bf16 %v1443, %v1441
        %v1478 = vpack.c.bf16 %v1446, %v1444
        %v1479 = vpack.c.bf16 %v1447, %v1445
        %v1480 = vld [vmem:[#allocation8] sm:$0xf]
        %v1481 = vld [vmem:[#allocation8 + $0x4] sm:$0xf]
        %v1482 = vld [vmem:[#allocation8 + $0x8] sm:$0xf]
        %v1483 = vld [vmem:[#allocation8 + $0xc] sm:$0xf]
        %v1484 = vld [vmem:[#allocation8 + $0x10] sm:$0xf]
        %v1485 = vld [vmem:[#allocation8 + $0x14] sm:$0xf]
        %v1486 = vld [vmem:[#allocation8 + $0x18] sm:$0xf]
        %v1487 = vld [vmem:[#allocation8 + $0x1c] sm:$0xf]
        %v1488 = vld [vmem:[#allocation8 + $0x20] sm:$0xf]
        %v1489 = vld [vmem:[#allocation8 + $0x24] sm:$0xf]
        %v1490 = vld [vmem:[#allocation8 + $0x28] sm:$0xf]
        %v1491 = vld [vmem:[#allocation8 + $0x2c] sm:$0xf]
        %v1492 = vld [vmem:[#allocation8 + $0x30] sm:$0xf]
        %v1493 = vld [vmem:[#allocation8 + $0x34] sm:$0xf]
        %v1494 = vld [vmem:[#allocation8 + $0x38] sm:$0xf]
        %v1495 = vld [vmem:[#allocation8 + $0x3c] sm:$0xf]
        %v1496 = vld [vmem:[#allocation8 + $0x40] sm:$0xf]
        %v1497 = vld [vmem:[#allocation8 + $0x44] sm:$0xf]
        %v1498 = vld [vmem:[#allocation8 + $0x48] sm:$0xf]
        %v1499 = vld [vmem:[#allocation8 + $0x4c] sm:$0xf]
        %v1500 = vld [vmem:[#allocation8 + $0x50] sm:$0xf]
        %v1501 = vld [vmem:[#allocation8 + $0x54] sm:$0xf]
        %v1502 = vld [vmem:[#allocation8 + $0x58] sm:$0xf]
        %v1503 = vld [vmem:[#allocation8 + $0x5c] sm:$0xf]
        %v1504 = vld [vmem:[#allocation8 + $0x60] sm:$0xf]
        %v1505 = vld [vmem:[#allocation8 + $0x64] sm:$0xf]
        %v1506 = vld [vmem:[#allocation8 + $0x68] sm:$0xf]
        %v1507 = vld [vmem:[#allocation8 + $0x6c] sm:$0xf]
        %v1508 = vld [vmem:[#allocation8 + $0x70] sm:$0xf]
        %v1509 = vld [vmem:[#allocation8 + $0x74] sm:$0xf]
        %v1510 = vld [vmem:[#allocation8 + $0x78] sm:$0xf]
        %v1511 = vld [vmem:[#allocation8 + $0x7c] sm:$0xf]
        %v1512 = vld [vmem:[%s4] sm:$0x1]
        %v1514 = vlaneseq
        %v1515 = vshrl.u32 %v1514, 7
        %v1516 = vsub.s32 0, %v1515
        %v1517 = vrot.slane %v1512, %v1516
        %v1551 = vunpack.c.l.b16 %v1480
        %v1552 = vunpack.c.l.b16 %v1481
        %v1553 = vunpack.c.l.b16 %v1482
        %v1554 = vunpack.c.l.b16 %v1483
        %v1555 = vunpack.c.l.b16 %v1484
        %v1556 = vunpack.c.l.b16 %v1485
        %v1557 = vunpack.c.l.b16 %v1486
        %v1558 = vunpack.c.l.b16 %v1487
        %v1559 = vunpack.c.l.b16 %v1488
        %v1560 = vunpack.c.l.b16 %v1489
        %v1561 = vunpack.c.l.b16 %v1490
        %v1562 = vunpack.c.l.b16 %v1491
        %v1563 = vunpack.c.l.b16 %v1492
        %v1564 = vunpack.c.l.b16 %v1493
        %v1565 = vunpack.c.l.b16 %v1494
        %v1566 = vunpack.c.l.b16 %v1495
        %v1567 = vunpack.c.l.b16 %v1496
        %v1568 = vunpack.c.l.b16 %v1497
        %v1569 = vunpack.c.l.b16 %v1498
        %v1570 = vunpack.c.l.b16 %v1499
        %v1571 = vunpack.c.l.b16 %v1500
        %v1572 = vunpack.c.l.b16 %v1501
        %v1573 = vunpack.c.l.b16 %v1502
        %v1574 = vunpack.c.l.b16 %v1503
        %v1575 = vunpack.c.l.b16 %v1504
        %v1576 = vunpack.c.l.b16 %v1505
        %v1577 = vunpack.c.l.b16 %v1506
        %v1578 = vunpack.c.l.b16 %v1507
        %v1579 = vunpack.c.l.b16 %v1508
        %v1580 = vunpack.c.l.b16 %v1509
        %v1581 = vunpack.c.l.b16 %v1510
        %v1582 = vunpack.c.l.b16 %v1511
        %v1583 = vpack.c.b16 %v1552, %v1551
        %v1584 = vpack.c.b16 %v1554, %v1553
        %v1585 = vpack.c.b16 %v1556, %v1555
        %v1586 = vpack.c.b16 %v1558, %v1557
        %v1587 = vpack.c.b16 %v1560, %v1559
        %v1588 = vpack.c.b16 %v1562, %v1561
        %v1589 = vpack.c.b16 %v1564, %v1563
        %v1590 = vpack.c.b16 %v1566, %v1565
        %v1591 = vpack.c.b16 %v1568, %v1567
        %v1592 = vpack.c.b16 %v1570, %v1569
        %v1593 = vpack.c.b16 %v1572, %v1571
        %v1594 = vpack.c.b16 %v1574, %v1573
        %v1595 = vpack.c.b16 %v1576, %v1575
        %v1596 = vpack.c.b16 %v1578, %v1577
        %v1597 = vpack.c.b16 %v1580, %v1579
        %v1598 = vpack.c.b16 %v1582, %v1581
        %1615 = vmatprep.subr.bf16.mxu0 0
        %1616 = vmatpush1.bf16.msra.mxu0 %v1590
        %1617 = vmatprep.subr.bf16.mxu0 0
        %1618 = vmatpush1.bf16.msra.mxu0 %v1589
        %1619 = vmatprep.subr.bf16.mxu0 0
        %1620 = vmatpush1.bf16.msra.mxu0 %v1588
        %1621 = vmatprep.subr.bf16.mxu0 0
        %1622 = vmatpush1.bf16.msra.mxu0 %v1587
        %1623 = vmatprep.subr.bf16.mxu0 0
        %1624 = vmatpush1.bf16.msra.mxu0 %v1586
        %1625 = vmatprep.subr.bf16.mxu0 0
        %1626 = vmatpush1.bf16.msra.mxu0 %v1585
        %1627 = vmatprep.subr.bf16.mxu0 0
        %1628 = vmatpush1.bf16.msra.mxu0 %v1584
        %1629 = vmatprep.subr.bf16.mxu0 0
        %1630 = vmatpush1.bf16.msra.mxu0 %v1583
        %1631 = vmatprep.subr.bf16.mxu0 0
        %1632 = vmatpush2.bf16.msra.mxu0 %v1598
        %1633 = vmatprep.subr.bf16.mxu0 0
        %1634 = vmatpush2.bf16.msra.mxu0 %v1597
        %1635 = vmatprep.subr.bf16.mxu0 0
        %1636 = vmatpush2.bf16.msra.mxu0 %v1596
        %1637 = vmatprep.subr.bf16.mxu0 0
        %1638 = vmatpush2.bf16.msra.mxu0 %v1595
        %1639 = vmatprep.subr.bf16.mxu0 0
        %1640 = vmatpush2.bf16.msra.mxu0 %v1594
        %1641 = vmatprep.subr.bf16.mxu0 0
        %1642 = vmatpush2.bf16.msra.mxu0 %v1593
        %1643 = vmatprep.subr.bf16.mxu0 0
        %1644 = vmatpush2.bf16.msra.mxu0 %v1592
        %1645 = vmatprep.subr.bf16.mxu0 0
        %1646 = vmatpush2.bf16.msra.mxu0 %v1591
        %1647 = vmatprep.mubr.bf16.mxu0 %v1449
        %1648 = vmatmul.mubr.bf16.gmra.mxu0 %v1448
        %v1649 = vpop.f32.mrf.mxu0
        %v1650 = vadd.f32 %v1517, %v1649
        %v1651 = vpop.f32.mrf.mxu0
        %v1652 = vpop.f32.mrf.mxu0
        %v1653 = vadd.f32 %v1517, %v1652
        %v1654 = vpop.f32.mrf.mxu0
        %1655 = vmatprep.mubr.bf16.mxu0 %v1451
        %1656 = vmatmul.mubr.bf16.gmra.mxu0 %v1450
        %v1657 = vpop.f32.mrf.mxu0
        %v1658 = vadd.f32 %v1517, %v1657
        %v1659 = vpop.f32.mrf.mxu0
        %v1660 = vpop.f32.mrf.mxu0
        %v1661 = vadd.f32 %v1517, %v1660
        %v1662 = vpop.f32.mrf.mxu0
        %1663 = vmatprep.mubr.bf16.mxu0 %v1453
        %1664 = vmatmul.mubr.bf16.gmra.mxu0 %v1452
        %v1665 = vpop.f32.mrf.mxu0
        %v1666 = vadd.f32 %v1517, %v1665
        %v1667 = vpop.f32.mrf.mxu0
        %v1668 = vpop.f32.mrf.mxu0
        %v1669 = vadd.f32 %v1517, %v1668
        %v1670 = vpop.f32.mrf.mxu0
        %1671 = vmatprep.mubr.bf16.mxu0 %v1455
        %1672 = vmatmul.mubr.bf16.gmra.mxu0 %v1454
        %v1673 = vpop.f32.mrf.mxu0
        %v1674 = vadd.f32 %v1517, %v1673
        %v1675 = vpop.f32.mrf.mxu0
        %v1676 = vpop.f32.mrf.mxu0
        %v1677 = vadd.f32 %v1517, %v1676
        %v1678 = vpop.f32.mrf.mxu0
        %1679 = vmatprep.mubr.bf16.mxu0 %v1457
        %1680 = vmatmul.mubr.bf16.gmra.mxu0 %v1456
        %v1681 = vpop.f32.mrf.mxu0
        %v1682 = vadd.f32 %v1517, %v1681
        %v1683 = vpop.f32.mrf.mxu0
        %v1684 = vpop.f32.mrf.mxu0
        %v1685 = vadd.f32 %v1517, %v1684
        %v1686 = vpop.f32.mrf.mxu0
        %1687 = vmatprep.mubr.bf16.mxu0 %v1459
        %1688 = vmatmul.mubr.bf16.gmra.mxu0 %v1458
        %v1689 = vpop.f32.mrf.mxu0
        %v1690 = vadd.f32 %v1517, %v1689
        %v1691 = vpop.f32.mrf.mxu0
        %v1692 = vpop.f32.mrf.mxu0
        %v1693 = vadd.f32 %v1517, %v1692
        %v1694 = vpop.f32.mrf.mxu0
        %1695 = vmatprep.mubr.bf16.mxu0 %v1461
        %1696 = vmatmul.mubr.bf16.gmra.mxu0 %v1460
        %v1697 = vpop.f32.mrf.mxu0
        %v1698 = vadd.f32 %v1517, %v1697
        %v1699 = vpop.f32.mrf.mxu0
        %v1700 = vpop.f32.mrf.mxu0
        %v1701 = vadd.f32 %v1517, %v1700
        %v1702 = vpop.f32.mrf.mxu0
        %1703 = vmatprep.mubr.bf16.mxu0 %v1463
        %1704 = vmatmul.mubr.bf16.gmra.mxu0 %v1462
        %v1705 = vpop.f32.mrf.mxu0
        %v1706 = vadd.f32 %v1517, %v1705
        %v1707 = vpop.f32.mrf.mxu0
        %v1708 = vpop.f32.mrf.mxu0
        %v1709 = vadd.f32 %v1517, %v1708
        %v1710 = vpop.f32.mrf.mxu0
        %1711 = vmatprep.mubr.bf16.mxu0 %v1465
        %1712 = vmatmul.mubr.bf16.gmra.mxu0 %v1464
        %v1713 = vpop.f32.mrf.mxu0
        %v1714 = vadd.f32 %v1517, %v1713
        %v1715 = vpop.f32.mrf.mxu0
        %v1716 = vpop.f32.mrf.mxu0
        %v1717 = vadd.f32 %v1517, %v1716
        %v1718 = vpop.f32.mrf.mxu0
        %1719 = vmatprep.mubr.bf16.mxu0 %v1467
        %1720 = vmatmul.mubr.bf16.gmra.mxu0 %v1466
        %v1721 = vpop.f32.mrf.mxu0
        %v1722 = vadd.f32 %v1517, %v1721
        %v1723 = vpop.f32.mrf.mxu0
        %v1724 = vpop.f32.mrf.mxu0
        %v1725 = vadd.f32 %v1517, %v1724
        %v1726 = vpop.f32.mrf.mxu0
        %1727 = vmatprep.mubr.bf16.mxu0 %v1469
        %1728 = vmatmul.mubr.bf16.gmra.mxu0 %v1468
        %v1729 = vpop.f32.mrf.mxu0
        %v1730 = vadd.f32 %v1517, %v1729
        %v1731 = vpop.f32.mrf.mxu0
        %v1732 = vpop.f32.mrf.mxu0
        %v1733 = vadd.f32 %v1517, %v1732
        %v1734 = vpop.f32.mrf.mxu0
        %1735 = vmatprep.mubr.bf16.mxu0 %v1471
        %1736 = vmatmul.mubr.bf16.gmra.mxu0 %v1470
        %v1737 = vpop.f32.mrf.mxu0
        %v1738 = vadd.f32 %v1517, %v1737
        %v1739 = vpop.f32.mrf.mxu0
        %v1740 = vpop.f32.mrf.mxu0
        %v1741 = vadd.f32 %v1517, %v1740
        %v1742 = vpop.f32.mrf.mxu0
        %1743 = vmatprep.mubr.bf16.mxu0 %v1473
        %1744 = vmatmul.mubr.bf16.gmra.mxu0 %v1472
        %v1745 = vpop.f32.mrf.mxu0
        %v1746 = vadd.f32 %v1517, %v1745
        %v1747 = vpop.f32.mrf.mxu0
        %v1748 = vpop.f32.mrf.mxu0
        %v1749 = vadd.f32 %v1517, %v1748
        %v1750 = vpop.f32.mrf.mxu0
        %1751 = vmatprep.mubr.bf16.mxu0 %v1475
        %1752 = vmatmul.mubr.bf16.gmra.mxu0 %v1474
        %v1753 = vpop.f32.mrf.mxu0
        %v1754 = vadd.f32 %v1517, %v1753
        %v1755 = vpop.f32.mrf.mxu0
        %v1756 = vpop.f32.mrf.mxu0
        %v1757 = vadd.f32 %v1517, %v1756
        %v1758 = vpop.f32.mrf.mxu0
        %1759 = vmatprep.mubr.bf16.mxu0 %v1477
        %1760 = vmatmul.mubr.bf16.gmra.mxu0 %v1476
        %v1761 = vpop.f32.mrf.mxu0
        %v1762 = vadd.f32 %v1517, %v1761
        %v1763 = vpop.f32.mrf.mxu0
        %v1764 = vpop.f32.mrf.mxu0
        %v1765 = vadd.f32 %v1517, %v1764
        %v1766 = vpop.f32.mrf.mxu0
        %1767 = vmatprep.mubr.bf16.mxu0 %v1479
        %1768 = vmatmul.mubr.bf16.gmra.mxu0 %v1478
        %v1769 = vpop.f32.mrf.mxu0
        %v1770 = vadd.f32 %v1517, %v1769
        %v1771 = vpop.f32.mrf.mxu0
        %v1772 = vpop.f32.mrf.mxu0
        %v1773 = vadd.f32 %v1517, %v1772
        %v1774 = vpop.f32.mrf.mxu0
        %1775 = vdwg.mxu0
        %1776 = vst [vmem:[%s284] sm:$0xff] %v1650
        %1777 = vst [vmem:[%s284 + $0x8] sm:$0xff] %v1653
        %1778 = vst [vmem:[%s284 + $0x10] sm:$0xff] %v1658
        %1779 = vst [vmem:[%s284 + $0x18] sm:$0xff] %v1661
        %1780 = vst [vmem:[%s284 + $0x20] sm:$0xff] %v1666
        %1781 = vst [vmem:[%s284 + $0x28] sm:$0xff] %v1669
        %1782 = vst [vmem:[%s284 + $0x30] sm:$0xff] %v1674
        %1783 = vst [vmem:[%s284 + $0x38] sm:$0xff] %v1677
        %1784 = vst [vmem:[%s284 + $0x40] sm:$0xff] %v1682
        %1785 = vst [vmem:[%s284 + $0x48] sm:$0xff] %v1685
        %1786 = vst [vmem:[%s284 + $0x50] sm:$0xff] %v1690
        %1787 = vst [vmem:[%s284 + $0x58] sm:$0xff] %v1693
        %1788 = vst [vmem:[%s284 + $0x60] sm:$0xff] %v1698
        %1789 = vst [vmem:[%s284 + $0x68] sm:$0xff] %v1701
        %1790 = vst [vmem:[%s284 + $0x70] sm:$0xff] %v1706
        %1791 = vst [vmem:[%s284 + $0x78] sm:$0xff] %v1709
        %1792 = vst [vmem:[%s284 + $0x80] sm:$0xff] %v1714
        %1793 = vst [vmem:[%s284 + $0x88] sm:$0xff] %v1717
        %1794 = vst [vmem:[%s284 + $0x90] sm:$0xff] %v1722
        %1795 = vst [vmem:[%s284 + $0x98] sm:$0xff] %v1725
        %1796 = vst [vmem:[%s284 + $0xa0] sm:$0xff] %v1730
        %1797 = vst [vmem:[%s284 + $0xa8] sm:$0xff] %v1733
        %1798 = vst [vmem:[%s284 + $0xb0] sm:$0xff] %v1738
        %1799 = vst [vmem:[%s284 + $0xb8] sm:$0xff] %v1741
        %1800 = vst [vmem:[%s284 + $0xc0] sm:$0xff] %v1746
        %1801 = vst [vmem:[%s284 + $0xc8] sm:$0xff] %v1749
        %1802 = vst [vmem:[%s284 + $0xd0] sm:$0xff] %v1754
        %1803 = vst [vmem:[%s284 + $0xd8] sm:$0xff] %v1757
        %1804 = vst [vmem:[%s284 + $0xe0] sm:$0xff] %v1762
        %1805 = vst [vmem:[%s284 + $0xe8] sm:$0xff] %v1765
        %1806 = vst [vmem:[%s284 + $0xf0] sm:$0xff] %v1770
        %1807 = vst [vmem:[%s284 + $0xf8] sm:$0xff] %v1773
        %s1808 = sand.u32 %s142, 1
        %s1809 = scalar_lea.sflag [#allocation4], %s1808
        %s1810 = sand.u32 %s142, 1
        %s1811 = smul.addr %s1810, 256
        %s1812 = scalar_lea.vmem [#allocation10], %s1811
        // Predicated region
        $region57: #{tpu_custom_call.1} parent=39 // pred_check
          %p1813 = pneg %p152
        $region58: #{tpu_custom_call.1} parent=39 // pred_check_branch
          %1815 = sbr.rel (%p1813) target = $region60
        $region59: #{tpu_custom_call.1} parent=39 // pred_region
          %s1816 = smul.u32 32, %s24
          %s1818 = ssub.s32 4096, 4096
          %1819 = vsyncadd %s1809, %s1818
          %s1820 = smul.addr %s1816, 128
          %s1821 = scalar_lea.hbm %s5, %s1820
          %s1822 = sshll.u32 %s1812, 4
          %s1823 = int_to_ptr.vmem [resolvable:$true] %s1822
          %1828 = dma.vmem_to_hbm [thread:$0]  %s1823, 4096, %s1821, %s1809, 128, 128, 8
        $region60: #{tpu_custom_call.1} parent=39 // pred_fallthru
          _
      $region40: #{tpu_custom_call.1} parent=5 // pred_fallthru
        _
      %p1829 = scmp.le.s32.totalorder 2, %s19
      // Predicated region
      $region61: #{tpu_custom_call.1} parent=5 // pred_check
        %p1830 = pneg %p1829
      $region62: #{tpu_custom_call.1} parent=5 // pred_check_branch
        %1832 = sbr.rel (%p1830) target = $region64
      $region63: #{tpu_custom_call.1} parent=5 // pred_region
        %s1833 = ssub.s32 %s19, 2
        // Predicated region
        $region65: #{tpu_custom_call.1} parent=63 // pred_check
          %p1834 = pneg %p158
        $region66: #{tpu_custom_call.1} parent=63 // pred_check_branch
          %1836 = sbr.rel (%p1834) target = $region68
        $region67: #{tpu_custom_call.1} parent=63 // pred_region
          %s1837 = sand.u32 %s143, 1
          %s1838 = scalar_lea.sflag [#allocation4], %s1837
          %s1839 = sand.u32 %s143, 1
          %s1840 = smul.addr %s1839, 256
          %s1841 = scalar_lea.vmem [#allocation10], %s1840
          %1842 = dma.done %s1838, 4096
        $region68: #{tpu_custom_call.1} parent=63 // pred_fallthru
          _
      $region64: #{tpu_custom_call.1} parent=5 // pred_fallthru
        _
    $region6: #{tpu_custom_call.1} parent=1 // loop_footer
      %s23 = sadd.s32 1, %s19
    $region7: #{tpu_custom_call.1} parent=1 // loop_footer_branch
      %18 = sbr.rel target = $region3
    $region8: #{tpu_custom_call.1} parent=1 // loop_exit
      _
    %1843 = vsyncpa [#allocation3], 1
    %s1844 = scalar_lea.sflag [#allocation3], 1
    %1845 = vsyncpa %s1844, 1
    %1846 = vsyncpa [#allocation6], 1
    %1847 = vsyncpa [#allocation9], 1
    %1848 = vsyncpa [#allocation4], 1
    %s1849 = scalar_lea.sflag [#allocation4], 1
    %1850 = vsyncpa %s1849, 1

</llo_original>
